<compile_context>
chip_gen: v6e
topology: v6e:2x2x1
jax: 0.10.0
libtpu: 0.0.40
codegen_flags: <defaults>
</compile_context>

<pallas_src>
import numpy as np
import jax
import jax.numpy as jnp
from jax.experimental import pallas as pl
from jax.experimental.pallas import tpu as pltpu


# ----------------------------------------------------------------------------
# host-side constant builders (numpy, done once)
# ----------------------------------------------------------------------------
def bilinear_up2_matrix(n_in: int) -> np.ndarray:
    """U (2*n_in, n_in): F.interpolate(scale_factor=2, mode='bilinear',
    align_corners=False) along one axis: out = U @ in."""
    n_out = 2 * n_in
    U = np.zeros((n_out, n_in), dtype=np.float32)
    for i in range(n_out):
        s = (i + 0.5) / 2.0 - 0.5              # half-pixel centers
        f = int(np.floor(s))
        frac = s - f
        i0 = min(max(f, 0), n_in - 1)
        i1 = min(max(f + 1, 0), n_in - 1)
        U[i, i0] += 1.0 - frac
        U[i, i1] += frac
    return U


def banded_conv_matrix_stacked(w_hwio: np.ndarray, w2: int) -> np.ndarray:
    """3x3 'SAME' conv along W as ONE stacked banded matrix (3 dh taps along N).

    G[wp*cin + c, dh*(w2*cout) + w*cout + o] = w[dh, wp - w + 1, c, o]
    so with activations packed as A[h, w*cin + c], a single matmul
      Z = A @ G                      # (H2, 3*W2*Cout)
    yields the three H-tap partial results as lane-aligned static slices.
    W-boundary zero padding is baked into the matrix.
    """
    _, _, cin, cout = w_hwio.shape
    G = np.zeros((3, w2 * cin, w2 * cout), np.float32)
    for dh in range(3):
        for w in range(w2):
            for dw in range(3):
                wp = w + dw - 1
                if 0 <= wp < w2:
                    G[dh, wp * cin:(wp + 1) * cin,
                      w * cout:(w + 1) * cout] = w_hwio[dh, dw]
    return np.concatenate([G[0], G[1], G[2]], axis=1)     # (w2*cin, 3*w2*cout)


def pack_params(params, *, cin, cs, h, w):
    """Precompute all kernel-side constant matrices (lane-dense packed layout)."""
    f32 = np.float32
    h2, w2 = 2 * h, 2 * w
    w1 = np.asarray(params["w1"], f32)            # (3,3,cin+cs,cout) HWIO, BN folded
    w2w = np.asarray(params["w2"], f32)           # (3,3,cout,cout)
    cout = w1.shape[-1]
    aw = np.asarray(params["att_w"], f32).reshape(cin + cs, 1)
    eye = lambda n: np.eye(n, dtype=f32)

    UH = bilinear_up2_matrix(h)                                       # (h2, h)
    UW = bilinear_up2_matrix(w)                                       # (w2, w)

    packed = dict(
        UH=UH,
        UWK=np.kron(UW.T, eye(cin)),                                  # (w*cin, w2*cin)
        AX=np.kron(eye(w2), aw[:cin]),                                # (w2*cin, w2)
        AS=np.kron(eye(w2), aw[cin:]),                                # (w2*cs,  w2)
        EX=np.kron(eye(w2), np.ones((1, cin), f32)),                  # (w2, w2*cin)
        ES=np.kron(eye(w2), np.ones((1, cs), f32)),                   # (w2, w2*cs)
        G1X=banded_conv_matrix_stacked(w1[:, :, :cin, :], w2),        # (w2*cin, 3*w2*cout)
        G1S=banded_conv_matrix_stacked(w1[:, :, cin:, :], w2),        # (w2*cs,  3*w2*cout)
        B1=np.tile(np.asarray(params["b1"], f32).reshape(1, cout), (1, w2)),
        G2=banded_conv_matrix_stacked(w2w, w2),                       # (w2*cout, 3*w2*cout)
        B2=np.tile(np.asarray(params["b2"], f32).reshape(1, cout), (1, w2)),
        S0=np.eye(h2, k=-1, dtype=f32),                               # picks y[h-1]
        S2=np.eye(h2, k=+1, dtype=f32),                               # picks y[h+1]
        ATTB=np.asarray(params["att_b"], f32).reshape(1, 1),          # scalar -> SMEM
    )
    return {k: jnp.asarray(v) for k, v in packed.items()}


# ----------------------------------------------------------------------------
# Pallas kernel: one batch element per grid step, everything resident in VMEM
# ----------------------------------------------------------------------------
def attention_unet_block_kernel(
        x_ref, skip_ref,                    # packed activations
        uh_ref, uwk_ref,                    # bilinear upsample matrices
        ax_ref, as_ref, ex_ref, es_ref,     # attention gate (weight-split, packed)
        g1x_ref, g1s_ref, b1_ref,           # conv1 (xu part / skip part) + bias row
        g2_ref, b2_ref,                     # conv2 + bias row
        s0_ref, s2_ref,                     # row-shift matrices for dh = 0 / 2
        attb_ref,                           # SMEM scalar: attention bias
        o_ref):
    f32 = jnp.float32

    def mm(a, b):
        return jnp.dot(a, b, preferred_element_type=f32)

    x2d = x_ref[0]        # (H,  W*Cin)   channel-packed minor dim
    sk = skip_ref[0]      # (H2, W2*Cs)

    # 1) bilinear x2 upsample, channel-batched: rows then (packed) columns.
    xu = mm(mm(uh_ref[...], x2d), uwk_ref[...])                    # (H2, W2*Cin)

    # 2+3) attention gate; the channel concat is eliminated by splitting the
    #      1x1-conv weight into xu / skip rows. sigmoid -> EUP.
    logit = mm(xu, ax_ref[...]) + mm(sk, as_ref[...]) + attb_ref[0, 0]   # (H2, W2)
    gate = jax.nn.sigmoid(logit)
    gxu = xu * mm(gate, ex_ref[...])       # gate broadcast into Cin-groups
    gsk = sk * mm(gate, es_ref[...])       # gate broadcast into Cs-groups

    # 4/5) 3x3 conv + folded BN + ReLU:
    #   one wide matmul per activation part gives all three dh-tap partials
    #   stacked along N (lane-aligned static slices afterwards); the H taps are
    #   combined with two tiny row-shift matmuls whose zero rows supply the
    #   H-boundary zero padding.
    def combine_hw_taps(z, wc, b_row):
        y0 = z[:, :wc]
        y1 = z[:, wc:2 * wc]
        y2 = z[:, 2 * wc:]
        acc = y1 + mm(s0_ref[...], y0) + mm(s2_ref[...], y2)
        return jnp.maximum(acc + b_row, 0.0)                       # (H2, wc)

    wc1 = g1x_ref.shape[1] // 3
    z1 = mm(gxu, g1x_ref[...]) + mm(gsk, g1s_ref[...])             # (H2, 3*W2*Cout)
    a1 = combine_hw_taps(z1, wc1, b1_ref[...])

    wc2 = g2_ref.shape[1] // 3
    z2 = mm(a1, g2_ref[...])                                       # (H2, 3*W2*Cout)
    a2 = combine_hw_taps(z2, wc2, b2_ref[...])

    o_ref[0] = a2.astype(o_ref.dtype)


# ----------------------------------------------------------------------------
# wrapper
# ----------------------------------------------------------------------------
def attention_unet_block(x_nchw, skip_nchw, packed):
    B, Cin, H, W = x_nchw.shape
    _, Cs, H2, W2 = skip_nchw.shape
    Cout = packed["B1"].shape[1] // W2

    # NCHW -> channel-packed 2-D per image: minor dim = W*C (lane-dense).
    x_p = jnp.transpose(x_nchw, (0, 2, 3, 1)).reshape(B, H, W * Cin).astype(jnp.float32)
    sk_p = jnp.transpose(skip_nchw, (0, 2, 3, 1)).reshape(B, H2, W2 * Cs).astype(jnp.float32)

    w_names = ("UH", "UWK", "AX", "AS", "EX", "ES",
               "G1X", "G1S", "B1", "G2", "B2", "S0", "S2")
    weights = [packed[k] for k in w_names]
    # constant index_maps -> weight blocks are fetched once and stay resident.
    w_specs = [pl.BlockSpec(tuple(wt.shape), lambda b, _n=wt.ndim: (0,) * _n)
               for wt in weights]

    mmf = lambda M, K, N: 2 * M * K * N
    flops = B * (
        mmf(H2, H, W * Cin) + mmf(H2, W * Cin, W2 * Cin)
        + mmf(H2, W2 * Cin, W2) + mmf(H2, W2 * Cs, W2)
        + mmf(H2, W2, W2 * Cin) + mmf(H2, W2, W2 * Cs)
        + mmf(H2, W2 * Cin, 3 * W2 * Cout) + mmf(H2, W2 * Cs, 3 * W2 * Cout)
        + mmf(H2, W2 * Cout, 3 * W2 * Cout)
        + 4 * mmf(H2, H2, W2 * Cout))
    bytes_accessed = 4 * (x_p.size + sk_p.size + B * H2 * W2 * Cout
                          + sum(int(np.prod(wt.shape)) for wt in weights) + 1)

    out = pl.pallas_call(
        attention_unet_block_kernel,
        out_shape=jax.ShapeDtypeStruct((B, H2, W2 * Cout), jnp.float32),
        grid=(B,),
        in_specs=[
            pl.BlockSpec((1, H, W * Cin), lambda b: (b, 0, 0)),
            pl.BlockSpec((1, H2, W2 * Cs), lambda b: (b, 0, 0)),
            *w_specs,
            pl.BlockSpec(memory_space=pltpu.MemorySpace.SMEM),      # att bias scalar
        ],
        out_specs=pl.BlockSpec((1, H2, W2 * Cout), lambda b: (b, 0, 0)),
        compiler_params=pltpu.CompilerParams(
            dimension_semantics=("parallel",),      # B >= 2 -> both v7x TCs busy
            vmem_limit_bytes=32 * 1024 * 1024),
        cost_estimate=pl.CostEstimate(
            flops=int(flops),
            transcendentals=int(B * H2 * W2),
            bytes_accessed=int(bytes_accessed)),
    )(x_p, sk_p, *weights, packed["ATTB"])

    # packed minor (w*Cout + o) -> NCHW
    return jnp.transpose(out.reshape(B, H2, W2, Cout), (0, 3, 1, 2))


# ----------------------------------------------------------------------------
# pure-JAX reference (same math, XLA ops) for validation
# ----------------------------------------------------------------------------
def reference_forward(x_nchw, skip_nchw, params):
    x = jnp.transpose(x_nchw, (0, 2, 3, 1)).astype(jnp.float32)
    skip = jnp.transpose(skip_nchw, (0, 2, 3, 1)).astype(jnp.float32)
    xu = jnp.einsum("ph,bhwc->bpwc", params["U_h"], x)
    xu = jnp.einsum("qw,bpwc->bpqc", params["U_w"], xu)
    cat = jnp.concatenate([xu, skip], axis=-1)
    gate = jax.nn.sigmoid(
        jnp.einsum("bhwc,co->bhwo", cat, params["att_w"]) + params["att_b"][0, 0])
    cat = cat * gate
    dn = ("NHWC", "HWIO", "NHWC")
    y = jax.lax.conv_general_dilated(cat, params["w1"], (1, 1), "SAME",
                                     dimension_numbers=dn) + params["b1"]
    y = jnp.maximum(y, 0.0)
    y = jax.lax.conv_general_dilated(y, params["w2"], (1, 1), "SAME",
                                     dimension_numbers=dn) + params["b2"]
    y = jnp.maximum(y, 0.0)
    return jnp.transpose(y, (0, 3, 1, 2))


# ----------------------------------------------------------------------------
# main
# ----------------------------------------------------------------------------
if __name__ == "__main__":
    f32 = jnp.float32
    B, Cin, Cs, Cout = 2, 4, 4, 8
    H, W = 8, 8
    H2, W2 = 2 * H, 2 * W
    Ccat = Cin + Cs

    key = jax.random.PRNGKey(0)
    ks = jax.random.split(key, 8)

    x = jax.random.normal(ks[0], (B, Cin, H, W), f32)        # input feature map (NCHW)
    skip = jax.random.normal(ks[1], (B, Cs, H2, W2), f32)    # skip connection (NCHW)

    def conv_bn_folded(k, cin, cout):
        # Conv2d(cin, cout, 3, pad=1) + BatchNorm2d(cout) eval-mode, folded. HWIO.
        k1, k2 = jax.random.split(k)
        w = 0.2 * jax.random.normal(k1, (3, 3, cin, cout), f32)
        b = 0.05 * jax.random.normal(k2, (cout,), f32)
        gamma = 1.0 + 0.1 * jnp.arange(cout, dtype=f32)
        beta = 0.02 * jnp.arange(cout, dtype=f32)
        mean = 0.01 * jnp.arange(cout, dtype=f32)
        var = 1.0 + 0.05 * jnp.arange(cout, dtype=f32)
        scale = gamma / jnp.sqrt(var + 1e-5)
        return w * scale, ((b - mean) * scale + beta).reshape(1, cout)

    w1, b1 = conv_bn_folded(ks[2], Ccat, Cout)
    w2, b2 = conv_bn_folded(ks[3], Cout, Cout)

    # TODO(synk): the `att` module is constructor-injected (unspecified) in the
    # PyTorch code; implemented here as a deterministic 1x1-conv sigmoid spatial gate.
    att_w = 0.3 * jax.random.normal(ks[4], (Ccat, 1), f32)
    att_b = jnp.full((1, 1), 0.1, f32)

    params = dict(
        U_h=jnp.asarray(bilinear_up2_matrix(H)),
        U_w=jnp.asarray(bilinear_up2_matrix(W)),
        att_w=att_w, att_b=att_b,
        w1=w1, b1=b1, w2=w2, b2=b2,
    )
    packed = pack_params(params, cin=Cin, cs=Cs, h=H, w=W)

    out = attention_unet_block(x, skip, packed)
    out = jax.block_until_ready(out)

    ref = jax.block_until_ready(reference_forward(x, skip, params))
    np.testing.assert_allclose(np.asarray(out), np.asarray(ref), rtol=1e-3, atol=1e-3)
    assert out.shape == (B, Cout, H2, W2)

    print("KERNEL_OK")
</pallas_src>

<mosaic_0001>
module attributes {stable_mosaic.version = 11 : i64} {
  func.func @attention_unet_block_kernel(%arg0: i32, %arg1: memref<1x8x32xf32, #tpu.memory_space<vmem>>, %arg2: memref<1x16x64xf32, #tpu.memory_space<vmem>>, %arg3: memref<16x8xf32, #tpu.memory_space<vmem>>, %arg4: memref<32x64xf32, #tpu.memory_space<vmem>>, %arg5: memref<64x16xf32, #tpu.memory_space<vmem>>, %arg6: memref<64x16xf32, #tpu.memory_space<vmem>>, %arg7: memref<16x64xf32, #tpu.memory_space<vmem>>, %arg8: memref<16x64xf32, #tpu.memory_space<vmem>>, %arg9: memref<64x384xf32, #tpu.memory_space<vmem>>, %arg10: memref<64x384xf32, #tpu.memory_space<vmem>>, %arg11: memref<1x128xf32, #tpu.memory_space<vmem>>, %arg12: memref<128x384xf32, #tpu.memory_space<vmem>>, %arg13: memref<1x128xf32, #tpu.memory_space<vmem>>, %arg14: memref<16x16xf32, #tpu.memory_space<vmem>>, %arg15: memref<16x16xf32, #tpu.memory_space<vmem>>, %arg16: memref<1x1xf32, #tpu.memory_space<smem>>, %arg17: memref<1x16x128xf32, #tpu.memory_space<vmem>>) attributes {dimension_semantics = [#tpu.dimension_semantics<parallel>], iteration_bounds = array<i64: 2>, scalar_prefetch = 0 : i64, scratch_operands = 0 : i64, tpu.core_type = #tpu.core_type<tc>, window_params = [{transform_indices = @transform_0, window_bounds = array<i64: 1, 8, 32>}, {transform_indices = @transform_1, window_bounds = array<i64: 1, 16, 64>}, {pipeline_mode = #tpu.pipeline_mode<synchronous>, transform_indices = @transform_2, window_bounds = array<i64: 16, 8>}, {pipeline_mode = #tpu.pipeline_mode<synchronous>, transform_indices = @transform_3, window_bounds = array<i64: 32, 64>}, {pipeline_mode = #tpu.pipeline_mode<synchronous>, transform_indices = @transform_4, window_bounds = array<i64: 64, 16>}, {pipeline_mode = #tpu.pipeline_mode<synchronous>, transform_indices = @transform_5, window_bounds = array<i64: 64, 16>}, {pipeline_mode = #tpu.pipeline_mode<synchronous>, transform_indices = @transform_6, window_bounds = array<i64: 16, 64>}, {pipeline_mode = #tpu.pipeline_mode<synchronous>, transform_indices = @transform_7, window_bounds = array<i64: 16, 64>}, {pipeline_mode = #tpu.pipeline_mode<synchronous>, transform_indices = @transform_8, window_bounds = array<i64: 64, 384>}, {pipeline_mode = #tpu.pipeline_mode<synchronous>, transform_indices = @transform_9, window_bounds = array<i64: 64, 384>}, {pipeline_mode = #tpu.pipeline_mode<synchronous>, transform_indices = @transform_10, window_bounds = array<i64: 1, 128>}, {pipeline_mode = #tpu.pipeline_mode<synchronous>, transform_indices = @transform_11, window_bounds = array<i64: 128, 384>}, {pipeline_mode = #tpu.pipeline_mode<synchronous>, transform_indices = @transform_12, window_bounds = array<i64: 1, 128>}, {pipeline_mode = #tpu.pipeline_mode<synchronous>, transform_indices = @transform_13, window_bounds = array<i64: 16, 16>}, {pipeline_mode = #tpu.pipeline_mode<synchronous>, transform_indices = @transform_14, window_bounds = array<i64: 16, 16>}, {transform_indices = @transform_15, window_bounds = array<i64: 1, 1>}, {transform_indices = @transform_16, window_bounds = array<i64: 1, 16, 128>}]} {
    %c0 = arith.constant 0 : index
    %c0_0 = arith.constant 0 : index
    %c0_1 = arith.constant 0 : index
    %0 = vector.load %arg1[%c0, %c0_0, %c0_1] : memref<1x8x32xf32, #tpu.memory_space<vmem>>, vector<1x8x32xf32>
    %1 = vector.shape_cast %0 : vector<1x8x32xf32> to vector<8x32xf32>
    %c0_2 = arith.constant 0 : index
    %c0_3 = arith.constant 0 : index
    %c0_4 = arith.constant 0 : index
    %2 = vector.load %arg2[%c0_2, %c0_3, %c0_4] : memref<1x16x64xf32, #tpu.memory_space<vmem>>, vector<1x16x64xf32>
    %3 = vector.shape_cast %2 : vector<1x16x64xf32> to vector<16x64xf32>
    %c0_5 = arith.constant 0 : index
    %c0_6 = arith.constant 0 : index
    %4 = vector.load %arg3[%c0_5, %c0_6] : memref<16x8xf32, #tpu.memory_space<vmem>>, vector<16x8xf32>
    %cst = arith.constant dense<0.000000e+00> : vector<16x32xf32>
    %5 = tpu.matmul %4, %1, %cst {dimension_numbers = #tpu.dot_dimension_numbers<[1], [0], [0], [1], [0, 0, 1, 1], [], []>} : vector<16x8xf32>, vector<8x32xf32>, vector<16x32xf32> -> vector<16x32xf32>
    %c0_7 = arith.constant 0 : index
    %c0_8 = arith.constant 0 : index
    %6 = vector.load %arg4[%c0_7, %c0_8] : memref<32x64xf32, #tpu.memory_space<vmem>>, vector<32x64xf32>
    %cst_9 = arith.constant dense<0.000000e+00> : vector<16x64xf32>
    %7 = tpu.matmul %5, %6, %cst_9 {dimension_numbers = #tpu.dot_dimension_numbers<[1], [0], [0], [1], [0, 0, 1, 1], [], []>} : vector<16x32xf32>, vector<32x64xf32>, vector<16x64xf32> -> vector<16x64xf32>
    %c0_10 = arith.constant 0 : index
    %c0_11 = arith.constant 0 : index
    %8 = vector.load %arg5[%c0_10, %c0_11] : memref<64x16xf32, #tpu.memory_space<vmem>>, vector<64x16xf32>
    %cst_12 = arith.constant dense<0.000000e+00> : vector<16x16xf32>
    %9 = tpu.matmul %7, %8, %cst_12 {dimension_numbers = #tpu.dot_dimension_numbers<[1], [0], [0], [1], [0, 0, 1, 1], [], []>} : vector<16x64xf32>, vector<64x16xf32>, vector<16x16xf32> -> vector<16x16xf32>
    %c0_13 = arith.constant 0 : index
    %c0_14 = arith.constant 0 : index
    %10 = vector.load %arg6[%c0_13, %c0_14] : memref<64x16xf32, #tpu.memory_space<vmem>>, vector<64x16xf32>
    %cst_15 = arith.constant dense<0.000000e+00> : vector<16x16xf32>
    %11 = tpu.matmul %3, %10, %cst_15 {dimension_numbers = #tpu.dot_dimension_numbers<[1], [0], [0], [1], [0, 0, 1, 1], [], []>} : vector<16x64xf32>, vector<64x16xf32>, vector<16x16xf32> -> vector<16x16xf32>
    %12 = arith.addf %9, %11 : vector<16x16xf32>
    %c0_16 = arith.constant 0 : index
    %c0_17 = arith.constant 0 : index
    %13 = memref.load %arg16[%c0_16, %c0_17] : memref<1x1xf32, #tpu.memory_space<smem>>
    %14 = vector.broadcast %13 : f32 to vector<16x16xf32>
    %15 = arith.addf %12, %14 : vector<16x16xf32>
    %16 = arith.negf %15 : vector<16x16xf32>
    %17 = math.exp %16 : vector<16x16xf32>
    %cst_18 = arith.constant 1.000000e+00 : f32
    %18 = vector.broadcast %cst_18 : f32 to vector<16x16xf32>
    %19 = arith.addf %18, %17 : vector<16x16xf32>
    %20 = arith.divf %18, %19 : vector<16x16xf32>
    %c0_19 = arith.constant 0 : index
    %c0_20 = arith.constant 0 : index
    %21 = vector.load %arg7[%c0_19, %c0_20] : memref<16x64xf32, #tpu.memory_space<vmem>>, vector<16x64xf32>
    %cst_21 = arith.constant dense<0.000000e+00> : vector<16x64xf32>
    %22 = tpu.matmul %20, %21, %cst_21 {dimension_numbers = #tpu.dot_dimension_numbers<[1], [0], [0], [1], [0, 0, 1, 1], [], []>} : vector<16x16xf32>, vector<16x64xf32>, vector<16x64xf32> -> vector<16x64xf32>
    %23 = arith.mulf %7, %22 : vector<16x64xf32>
    %c0_22 = arith.constant 0 : index
    %c0_23 = arith.constant 0 : index
    %24 = vector.load %arg8[%c0_22, %c0_23] : memref<16x64xf32, #tpu.memory_space<vmem>>, vector<16x64xf32>
    %cst_24 = arith.constant dense<0.000000e+00> : vector<16x64xf32>
    %25 = tpu.matmul %20, %24, %cst_24 {dimension_numbers = #tpu.dot_dimension_numbers<[1], [0], [0], [1], [0, 0, 1, 1], [], []>} : vector<16x16xf32>, vector<16x64xf32>, vector<16x64xf32> -> vector<16x64xf32>
    %26 = arith.mulf %3, %25 : vector<16x64xf32>
    %c0_25 = arith.constant 0 : index
    %c0_26 = arith.constant 0 : index
    %27 = vector.load %arg9[%c0_25, %c0_26] : memref<64x384xf32, #tpu.memory_space<vmem>>, vector<64x384xf32>
    %cst_27 = arith.constant dense<0.000000e+00> : vector<16x384xf32>
    %28 = tpu.matmul %23, %27, %cst_27 {dimension_numbers = #tpu.dot_dimension_numbers<[1], [0], [0], [1], [0, 0, 1, 1], [], []>} : vector<16x64xf32>, vector<64x384xf32>, vector<16x384xf32> -> vector<16x384xf32>
    %c0_28 = arith.constant 0 : index
    %c0_29 = arith.constant 0 : index
    %29 = vector.load %arg10[%c0_28, %c0_29] : memref<64x384xf32, #tpu.memory_space<vmem>>, vector<64x384xf32>
    %cst_30 = arith.constant dense<0.000000e+00> : vector<16x384xf32>
    %30 = tpu.matmul %26, %29, %cst_30 {dimension_numbers = #tpu.dot_dimension_numbers<[1], [0], [0], [1], [0, 0, 1, 1], [], []>} : vector<16x64xf32>, vector<64x384xf32>, vector<16x384xf32> -> vector<16x384xf32>
    %31 = arith.addf %28, %30 : vector<16x384xf32>
    %c0_31 = arith.constant 0 : index
    %c0_32 = arith.constant 0 : index
    %32 = vector.load %arg11[%c0_31, %c0_32] : memref<1x128xf32, #tpu.memory_space<vmem>>, vector<1x128xf32>
    %33 = vector.extract_strided_slice %31 {offsets = [0, 0], sizes = [16, 128], strides = [1, 1]} : vector<16x384xf32> to vector<16x128xf32>
    %34 = vector.extract_strided_slice %31 {offsets = [0, 128], sizes = [16, 128], strides = [1, 1]} : vector<16x384xf32> to vector<16x128xf32>
    %35 = vector.extract_strided_slice %31 {offsets = [0, 256], sizes = [16, 128], strides = [1, 1]} : vector<16x384xf32> to vector<16x128xf32>
    %c0_33 = arith.constant 0 : index
    %c0_34 = arith.constant 0 : index
    %36 = vector.load %arg14[%c0_33, %c0_34] : memref<16x16xf32, #tpu.memory_space<vmem>>, vector<16x16xf32>
    %cst_35 = arith.constant dense<0.000000e+00> : vector<16x128xf32>
    %37 = tpu.matmul %36, %33, %cst_35 {dimension_numbers = #tpu.dot_dimension_numbers<[1], [0], [0], [1], [0, 0, 1, 1], [], []>} : vector<16x16xf32>, vector<16x128xf32>, vector<16x128xf32> -> vector<16x128xf32>
    %38 = arith.addf %34, %37 : vector<16x128xf32>
    %c0_36 = arith.constant 0 : index
    %c0_37 = arith.constant 0 : index
    %39 = vector.load %arg15[%c0_36, %c0_37] : memref<16x16xf32, #tpu.memory_space<vmem>>, vector<16x16xf32>
    %cst_38 = arith.constant dense<0.000000e+00> : vector<16x128xf32>
    %40 = tpu.matmul %39, %35, %cst_38 {dimension_numbers = #tpu.dot_dimension_numbers<[1], [0], [0], [1], [0, 0, 1, 1], [], []>} : vector<16x16xf32>, vector<16x128xf32>, vector<16x128xf32> -> vector<16x128xf32>
    %41 = arith.addf %38, %40 : vector<16x128xf32>
    %42 = vector.broadcast %32 : vector<1x128xf32> to vector<16x128xf32>
    %43 = arith.addf %41, %42 : vector<16x128xf32>
    %cst_39 = arith.constant 0.000000e+00 : f32
    %44 = vector.broadcast %cst_39 : f32 to vector<16x128xf32>
    %45 = arith.maximumf %43, %44 : vector<16x128xf32>
    %c0_40 = arith.constant 0 : index
    %c0_41 = arith.constant 0 : index
    %46 = vector.load %arg12[%c0_40, %c0_41] : memref<128x384xf32, #tpu.memory_space<vmem>>, vector<128x384xf32>
    %cst_42 = arith.constant dense<0.000000e+00> : vector<16x384xf32>
    %47 = tpu.matmul %45, %46, %cst_42 {dimension_numbers = #tpu.dot_dimension_numbers<[1], [0], [0], [1], [0, 0, 1, 1], [], []>} : vector<16x128xf32>, vector<128x384xf32>, vector<16x384xf32> -> vector<16x384xf32>
    %c0_43 = arith.constant 0 : index
    %c0_44 = arith.constant 0 : index
    %48 = vector.load %arg13[%c0_43, %c0_44] : memref<1x128xf32, #tpu.memory_space<vmem>>, vector<1x128xf32>
    %49 = vector.extract_strided_slice %47 {offsets = [0, 0], sizes = [16, 128], strides = [1, 1]} : vector<16x384xf32> to vector<16x128xf32>
    %50 = vector.extract_strided_slice %47 {offsets = [0, 128], sizes = [16, 128], strides = [1, 1]} : vector<16x384xf32> to vector<16x128xf32>
    %51 = vector.extract_strided_slice %47 {offsets = [0, 256], sizes = [16, 128], strides = [1, 1]} : vector<16x384xf32> to vector<16x128xf32>
    %c0_45 = arith.constant 0 : index
    %c0_46 = arith.constant 0 : index
    %52 = vector.load %arg14[%c0_45, %c0_46] : memref<16x16xf32, #tpu.memory_space<vmem>>, vector<16x16xf32>
    %cst_47 = arith.constant dense<0.000000e+00> : vector<16x128xf32>
    %53 = tpu.matmul %52, %49, %cst_47 {dimension_numbers = #tpu.dot_dimension_numbers<[1], [0], [0], [1], [0, 0, 1, 1], [], []>} : vector<16x16xf32>, vector<16x128xf32>, vector<16x128xf32> -> vector<16x128xf32>
    %54 = arith.addf %50, %53 : vector<16x128xf32>
    %c0_48 = arith.constant 0 : index
    %c0_49 = arith.constant 0 : index
    %55 = vector.load %arg15[%c0_48, %c0_49] : memref<16x16xf32, #tpu.memory_space<vmem>>, vector<16x16xf32>
    %cst_50 = arith.constant dense<0.000000e+00> : vector<16x128xf32>
    %56 = tpu.matmul %55, %51, %cst_50 {dimension_numbers = #tpu.dot_dimension_numbers<[1], [0], [0], [1], [0, 0, 1, 1], [], []>} : vector<16x16xf32>, vector<16x128xf32>, vector<16x128xf32> -> vector<16x128xf32>
    %57 = arith.addf %54, %56 : vector<16x128xf32>
    %58 = vector.broadcast %48 : vector<1x128xf32> to vector<16x128xf32>
    %59 = arith.addf %57, %58 : vector<16x128xf32>
    %cst_51 = arith.constant 0.000000e+00 : f32
    %60 = vector.broadcast %cst_51 : f32 to vector<16x128xf32>
    %61 = arith.maximumf %59, %60 : vector<16x128xf32>
    %c0_52 = arith.constant 0 : index
    %c0_53 = arith.constant 0 : index
    %c0_54 = arith.constant 0 : index
    %62 = vector.load %arg17[%c0_52, %c0_53, %c0_54] : memref<1x16x128xf32, #tpu.memory_space<vmem>>, vector<1x16x128xf32>
    %63 = vector.shape_cast %62 : vector<1x16x128xf32> to vector<16x128xf32>
    %64 = vector.shape_cast %61 : vector<16x128xf32> to vector<1x16x128xf32>
    tpu.vector_store %arg17[%c0_52, %c0_53, %c0_54], %64 {strides = array<i32>} : memref<1x16x128xf32, #tpu.memory_space<vmem>>, vector<1x16x128xf32>,
    return
  }
  func.func @transform_0(%arg0: i32) -> (i32, i32, i32) {
    %c0_i32 = arith.constant 0 : i32
    %c0_i32_0 = arith.constant 0 : i32
    %c0_i32_1 = arith.constant 0 : i32
    return %arg0, %c0_i32, %c0_i32_0 : i32, i32, i32
  }
  func.func @transform_1(%arg0: i32) -> (i32, i32, i32) {
    %c0_i32 = arith.constant 0 : i32
    %c0_i32_0 = arith.constant 0 : i32
    %c0_i32_1 = arith.constant 0 : i32
    return %arg0, %c0_i32, %c0_i32_0 : i32, i32, i32
  }
  func.func @transform_2(%arg0: i32) -> (i32, i32) {
    %c0_i32 = arith.constant 0 : i32
    %c0_i32_0 = arith.constant 0 : i32
    %c0_i32_1 = arith.constant 0 : i32
    return %c0_i32, %c0_i32_0 : i32, i32
  }
  func.func @transform_3(%arg0: i32) -> (i32, i32) {
    %c0_i32 = arith.constant 0 : i32
    %c0_i32_0 = arith.constant 0 : i32
    %c0_i32_1 = arith.constant 0 : i32
    return %c0_i32, %c0_i32_0 : i32, i32
  }
  func.func @transform_4(%arg0: i32) -> (i32, i32) {
    %c0_i32 = arith.constant 0 : i32
    %c0_i32_0 = arith.constant 0 : i32
    %c0_i32_1 = arith.constant 0 : i32
    return %c0_i32, %c0_i32_0 : i32, i32
  }
  func.func @transform_5(%arg0: i32) -> (i32, i32) {
    %c0_i32 = arith.constant 0 : i32
    %c0_i32_0 = arith.constant 0 : i32
    %c0_i32_1 = arith.constant 0 : i32
    return %c0_i32, %c0_i32_0 : i32, i32
  }
  func.func @transform_6(%arg0: i32) -> (i32, i32) {
    %c0_i32 = arith.constant 0 : i32
    %c0_i32_0 = arith.constant 0 : i32
    %c0_i32_1 = arith.constant 0 : i32
    return %c0_i32, %c0_i32_0 : i32, i32
  }
  func.func @transform_7(%arg0: i32) -> (i32, i32) {
    %c0_i32 = arith.constant 0 : i32
    %c0_i32_0 = arith.constant 0 : i32
    %c0_i32_1 = arith.constant 0 : i32
    return %c0_i32, %c0_i32_0 : i32, i32
  }
  func.func @transform_8(%arg0: i32) -> (i32, i32) {
    %c0_i32 = arith.constant 0 : i32
    %c0_i32_0 = arith.constant 0 : i32
    %c0_i32_1 = arith.constant 0 : i32
    return %c0_i32, %c0_i32_0 : i32, i32
  }
  func.func @transform_9(%arg0: i32) -> (i32, i32) {
    %c0_i32 = arith.constant 0 : i32
    %c0_i32_0 = arith.constant 0 : i32
    %c0_i32_1 = arith.constant 0 : i32
    return %c0_i32, %c0_i32_0 : i32, i32
  }
  func.func @transform_10(%arg0: i32) -> (i32, i32) {
    %c0_i32 = arith.constant 0 : i32
    %c0_i32_0 = arith.constant 0 : i32
    %c0_i32_1 = arith.constant 0 : i32
    return %c0_i32, %c0_i32_0 : i32, i32
  }
  func.func @transform_11(%arg0: i32) -> (i32, i32) {
    %c0_i32 = arith.constant 0 : i32
    %c0_i32_0 = arith.constant 0 : i32
    %c0_i32_1 = arith.constant 0 : i32
    return %c0_i32, %c0_i32_0 : i32, i32
  }
  func.func @transform_12(%arg0: i32) -> (i32, i32) {
    %c0_i32 = arith.constant 0 : i32
    %c0_i32_0 = arith.constant 0 : i32
    %c0_i32_1 = arith.constant 0 : i32
    return %c0_i32, %c0_i32_0 : i32, i32
  }
  func.func @transform_13(%arg0: i32) -> (i32, i32) {
    %c0_i32 = arith.constant 0 : i32
    %c0_i32_0 = arith.constant 0 : i32
    %c0_i32_1 = arith.constant 0 : i32
    return %c0_i32, %c0_i32_0 : i32, i32
  }
  func.func @transform_14(%arg0: i32) -> (i32, i32) {
    %c0_i32 = arith.constant 0 : i32
    %c0_i32_0 = arith.constant 0 : i32
    %c0_i32_1 = arith.constant 0 : i32
    return %c0_i32, %c0_i32_0 : i32, i32
  }
  func.func @transform_15(%arg0: i32) -> (i32, i32) {
    %c0_i32 = arith.constant 0 : i32
    %c0_i32_0 = arith.constant 0 : i32
    %c0_i32_1 = arith.constant 0 : i32
    return %c0_i32, %c0_i32_0 : i32, i32
  }
  func.func @transform_16(%arg0: i32) -> (i32, i32, i32) {
    %c0_i32 = arith.constant 0 : i32
    %c0_i32_0 = arith.constant 0 : i32
    %c0_i32_1 = arith.constant 0 : i32
    return %arg0, %c0_i32, %c0_i32_0 : i32, i32, i32
  }
}

</mosaic_0001>

<llo_original>
// kernel: tpu_custom_call.1
$region0: #{tpu_custom_call.1}
  #allocation0 [shape = 'u32[]', space=smem, size = 0x4, offset = 0x4, fixed_abs, tag = 'smem constant byte address 0x4 - core index']
  #allocation1 [shape = 'u32[144,128]{1,0:T(1,128)}', space=vmem, size = 0x12000, scoped, tag = 'internal scratch']
  #allocation2 [shape = 'f32[1,1]{1,0:T(1,128)S(6)}', space=smem, size = 0x200, scoped, tag = 'scoped memory for tpu_custom_call.1']
  %s0 = inlined_call_operand.hbm [shape: f32[2,8,32], index: 0, kind: input, shape index: {}]
  %s1 = inlined_call_operand.hbm [shape: f32[2,16,64], index: 1, kind: input, shape index: {}]
  %s2 = inlined_call_operand.vmem [shape: f32[16,8], index: 2, kind: input, shape index: {}]
  %s3 = inlined_call_operand.hbm [shape: f32[32,64], index: 3, kind: input, shape index: {}]
  %s4 = inlined_call_operand.vmem [shape: f32[64,16], index: 4, kind: input, shape index: {}]
  %s5 = inlined_call_operand.vmem [shape: f32[64,16], index: 5, kind: input, shape index: {}]
  %s6 = inlined_call_operand.hbm [shape: f32[16,64], index: 6, kind: input, shape index: {}]
  %s7 = inlined_call_operand.hbm [shape: f32[16,64], index: 7, kind: input, shape index: {}]
  %s8 = inlined_call_operand.vmem [shape: f32[64,384], index: 8, kind: input, shape index: {}]
  %s9 = inlined_call_operand.hbm [shape: f32[64,384], index: 9, kind: input, shape index: {}]
  %s10 = inlined_call_operand.vmem [shape: f32[1,128], index: 10, kind: input, shape index: {}]
  %s11 = inlined_call_operand.hbm [shape: f32[128,384], index: 11, kind: input, shape index: {}]
  %s12 = inlined_call_operand.hbm [shape: f32[1,128], index: 12, kind: input, shape index: {}]
  %s13 = inlined_call_operand.vmem [shape: f32[16,16], index: 13, kind: input, shape index: {}]
  %s14 = inlined_call_operand.hbm [shape: f32[16,16], index: 14, kind: input, shape index: {}]
  %s15 = inlined_call_operand.<no memory space> [shape: f32[1,1], index: 15, kind: input, shape index: {}]
  %s16 = inlined_call_operand.hbm [shape: f32[2,16,128], index: 16, kind: output, shape index: {}]
  %s17 = sld [smem:[#allocation0]]
  $region133: #{tpu_custom_call.1} parent=0
    _
  %s19 = ssub.s32 1, %s17
  %s20 = scalar_select 0, %s19, %s17
  %21 = sst [smem:[#allocation2]] %s15
  $region1: #{tpu_custom_call.1} parent=0
    #allocation3 [shape = 'u8[8192]{0}', space=vmem, size = 0x2000, scoped, tag = 'input window, operand 0']
    #allocation4 [shape = 's32[2]{0}', space=sflag, size = 0x8, scoped, tag = 'scoped memory for tpu_custom_call.1']
    #allocation5 [shape = 's32[2]{0}', space=sflag, size = 0x8, scoped, tag = 'scoped memory for tpu_custom_call.1']
    #allocation6 [shape = 'u8[16384]{0}', space=vmem, size = 0x4000, scoped, tag = 'input window, operand 1']
    #allocation7 [shape = 's32[2]{0}', space=sflag, size = 0x8, scoped, tag = 'scoped memory for tpu_custom_call.1']
    #allocation8 [shape = 'u8[16384]{0}', space=vmem, size = 0x4000, scoped, tag = 'input window, operand 3, single buffered']
    #allocation9 [shape = 'u8[8192]{0}', space=vmem, size = 0x2000, scoped, tag = 'input window, operand 6, single buffered']
    #allocation10 [shape = 's32[1]{0}', space=sflag, size = 0x4, scoped, tag = 'scoped memory for tpu_custom_call.1']
    #allocation11 [shape = 'u8[8192]{0}', space=vmem, size = 0x2000, scoped, tag = 'input window, operand 7, single buffered']
    #allocation12 [shape = 'u8[98304]{0}', space=vmem, size = 0x18000, scoped, tag = 'input window, operand 9, single buffered']
    #allocation13 [shape = 's32[1]{0}', space=sflag, size = 0x4, scoped, tag = 'scoped memory for tpu_custom_call.1']
    #allocation14 [shape = 'u8[196608]{0}', space=vmem, size = 0x30000, scoped, tag = 'input window, operand 11, single buffered']
    #allocation15 [shape = 'u8[512]{0}', space=vmem, size = 0x400, scoped, tag = 'input window, operand 12, single buffered']
    #allocation16 [shape = 's32[1]{0}', space=sflag, size = 0x4, scoped, tag = 'scoped memory for tpu_custom_call.1']
    #allocation17 [shape = 'u8[8192]{0}', space=vmem, size = 0x2000, scoped, tag = 'input window, operand 14, single buffered']
    #allocation18 [shape = 'u8[16384]{0}', space=vmem, size = 0x4000, scoped, tag = 'output window, operand 0']
    %22 = vsyncpa [#allocation4], 0
    %s23 = scalar_lea.sflag [#allocation4], 1
    %24 = vsyncpa %s23, 0
    %25 = vsyncpa [#allocation7], 0
    %s26 = scalar_lea.sflag [#allocation7], 1
    %27 = vsyncpa %s26, 0
    %28 = vsyncpa [#allocation10], 0
    %29 = vsyncpa [#allocation13], 0
    %30 = vsyncpa [#allocation16], 0
    %31 = vsyncpa [#allocation5], 0
    %s32 = scalar_lea.sflag [#allocation5], 1
    %33 = vsyncpa %s32, 0
    loop: start=0, step=1, limit=4
    $region2: #{tpu_custom_call.1} parent=1 // loop_pre_header
      _
    $region3: #{tpu_custom_call.1} parent=1 // loop_header
      %s35 = sphi 0, %s39
      %p36 = scmp.ge.s32.totalorder %s35, 4
      %s45 = sphi 0, %s47
      %s48 = sphi 0, %s45
      %s49 = sphi 0, %s48
      %s65 = sphi 0, %s49
      %s71 = sphi 0, %s73
      %s74 = sphi 0, %s71
      %s75 = sphi 0, %s74
      %s91 = sphi 0, %s75
      %s95 = sphi 0, %s95
      %s97 = sphi 0, %s95
      %s98 = sphi 0, %s97
      %s112 = sphi 0, %s98
      %s116 = sphi 0, %s116
      %s118 = sphi 0, %s116
      %s119 = sphi 0, %s118
      %s133 = sphi 0, %s119
      %s137 = sphi 0, %s137
      %s139 = sphi 0, %s137
      %s140 = sphi 0, %s139
      %s154 = sphi 0, %s140
      %s158 = sphi 0, %s158
      %s160 = sphi 0, %s158
      %s161 = sphi 0, %s160
      %s175 = sphi 0, %s161
      %s179 = sphi 0, %s179
      %s181 = sphi 0, %s179
      %s182 = sphi 0, %s181
      %s196 = sphi 0, %s182
      %s200 = sphi 0, %s200
      %s202 = sphi 0, %s200
      %s203 = sphi 0, %s202
      %s217 = sphi 0, %s203
      %s221 = sphi 0, %s221
      %s223 = sphi 0, %s221
      %s224 = sphi 0, %s223
      %s238 = sphi 0, %s224
      %s242 = sphi 0, %s242
      %s244 = sphi 0, %s242
      %s245 = sphi 0, %s244
      %s259 = sphi 0, %s245
      %s263 = sphi 0, %s263
      %s265 = sphi 0, %s263
      %s266 = sphi 0, %s265
      %s280 = sphi 0, %s266
      %s284 = sphi 0, %s284
      %s286 = sphi 0, %s284
      %s287 = sphi 0, %s286
      %s301 = sphi 0, %s287
      %s305 = sphi 0, %s305
      %s307 = sphi 0, %s305
      %s308 = sphi 0, %s307
      %s322 = sphi 0, %s308
      %s326 = sphi 0, %s326
      %s328 = sphi 0, %s326
      %s329 = sphi 0, %s328
      %s343 = sphi 0, %s329
      %s347 = sphi 0, %s347
      %s349 = sphi 0, %s347
      %s350 = sphi 0, %s349
      %s364 = sphi 0, %s350
      %s368 = sphi 0, %s368
      %s370 = sphi 0, %s368
      %s371 = sphi 0, %s370
      %s385 = sphi 0, %s371
      %s391 = sphi 0, %s393
      %s394 = sphi 0, %s391
      %s395 = sphi 0, %s394
      %s411 = sphi 0, %s395
    $region4: #{tpu_custom_call.1} parent=1 // loop_header_branch
      %38 = sbr.rel (%p36) target = $region8
    $region5: #{tpu_custom_call.1} parent=1 // loop_body
      %s40 = ssub.s32 %s35, 1
      %s41 = ssub.s32 %s35, 2
      %s42 = sadd.s32 %s35, 1
      %s43 = ssub.s32 %s35, %s42
      %p44 = scmp.eq.s32.totalorder %s43, 0
      %s46 = sadd.s32 %s45, 1
      %s47 = scalar_select %p44, %s45, %s46
      %p50 = pneg %p44
      %p51 = scmp.eq.s32.totalorder %s35, 1
      %p52 = por %p50, %p51
      %p53 = scmp.ne.s32.totalorder %s45, %s48
      %p54 = scmp.eq.s32.totalorder %s35, 0
      %p55 = por %p53, %p54
      %p56 = scmp.ne.s32.totalorder %s45, %s48
      %p57 = scmp.eq.s32.totalorder %s40, 1
      %p58 = por %p56, %p57
      %p59 = scmp.ne.s32.totalorder %s48, %s49
      %p60 = scmp.eq.s32.totalorder %s40, 0
      %p61 = por %p59, %p60
      %p62 = scmp.ne.s32.totalorder %s48, %s49
      %p63 = scmp.eq.s32.totalorder %s41, 1
      %p64 = por %p62, %p63
      %p66 = scmp.ne.s32.totalorder %s49, %s65
      %p67 = scmp.eq.s32.totalorder %s41, 0
      %p68 = por %p66, %p67
      %s69 = ssub.s32 %s35, %s42
      %p70 = scmp.eq.s32.totalorder %s69, 0
      %s72 = sadd.s32 %s71, 1
      %s73 = scalar_select %p70, %s71, %s72
      %p76 = pneg %p70
      %p77 = scmp.eq.s32.totalorder %s35, 1
      %p78 = por %p76, %p77
      %p79 = scmp.ne.s32.totalorder %s71, %s74
      %p80 = scmp.eq.s32.totalorder %s35, 0
      %p81 = por %p79, %p80
      %p82 = scmp.ne.s32.totalorder %s71, %s74
      %p83 = scmp.eq.s32.totalorder %s40, 1
      %p84 = por %p82, %p83
      %p85 = scmp.ne.s32.totalorder %s74, %s75
      %p86 = scmp.eq.s32.totalorder %s40, 0
      %p87 = por %p85, %p86
      %p88 = scmp.ne.s32.totalorder %s74, %s75
      %p89 = scmp.eq.s32.totalorder %s41, 1
      %p90 = por %p88, %p89
      %p92 = scmp.ne.s32.totalorder %s75, %s91
      %p93 = scmp.eq.s32.totalorder %s41, 0
      %p94 = por %p92, %p93
      %s96 = sadd.s32 %s95, 1
      %p99 = scmp.eq.s32.totalorder %s35, 1
      %p100 = scmp.ne.s32.totalorder %s95, %s97
      %p101 = scmp.eq.s32.totalorder %s35, 0
      %p102 = por %p100, %p101
      %p103 = scmp.ne.s32.totalorder %s95, %s97
      %p104 = scmp.eq.s32.totalorder %s40, 1
      %p105 = por %p103, %p104
      %p106 = scmp.ne.s32.totalorder %s97, %s98
      %p107 = scmp.eq.s32.totalorder %s40, 0
      %p108 = por %p106, %p107
      %p109 = scmp.ne.s32.totalorder %s97, %s98
      %p110 = scmp.eq.s32.totalorder %s41, 1
      %p111 = por %p109, %p110
      %p113 = scmp.ne.s32.totalorder %s98, %s112
      %p114 = scmp.eq.s32.totalorder %s41, 0
      %p115 = por %p113, %p114
      %s117 = sadd.s32 %s116, 1
      %p120 = scmp.eq.s32.totalorder %s35, 1
      %p121 = scmp.ne.s32.totalorder %s116, %s118
      %p122 = scmp.eq.s32.totalorder %s35, 0
      %p123 = por %p121, %p122
      %p124 = scmp.ne.s32.totalorder %s116, %s118
      %p125 = scmp.eq.s32.totalorder %s40, 1
      %p126 = por %p124, %p125
      %p127 = scmp.ne.s32.totalorder %s118, %s119
      %p128 = scmp.eq.s32.totalorder %s40, 0
      %p129 = por %p127, %p128
      %p130 = scmp.ne.s32.totalorder %s118, %s119
      %p131 = scmp.eq.s32.totalorder %s41, 1
      %p132 = por %p130, %p131
      %p134 = scmp.ne.s32.totalorder %s119, %s133
      %p135 = scmp.eq.s32.totalorder %s41, 0
      %p136 = por %p134, %p135
      %s138 = sadd.s32 %s137, 1
      %p141 = scmp.eq.s32.totalorder %s35, 1
      %p142 = scmp.ne.s32.totalorder %s137, %s139
      %p143 = scmp.eq.s32.totalorder %s35, 0
      %p144 = por %p142, %p143
      %p145 = scmp.ne.s32.totalorder %s137, %s139
      %p146 = scmp.eq.s32.totalorder %s40, 1
      %p147 = por %p145, %p146
      %p148 = scmp.ne.s32.totalorder %s139, %s140
      %p149 = scmp.eq.s32.totalorder %s40, 0
      %p150 = por %p148, %p149
      %p151 = scmp.ne.s32.totalorder %s139, %s140
      %p152 = scmp.eq.s32.totalorder %s41, 1
      %p153 = por %p151, %p152
      %p155 = scmp.ne.s32.totalorder %s140, %s154
      %p156 = scmp.eq.s32.totalorder %s41, 0
      %p157 = por %p155, %p156
      %s159 = sadd.s32 %s158, 1
      %p162 = scmp.eq.s32.totalorder %s35, 1
      %p163 = scmp.ne.s32.totalorder %s158, %s160
      %p164 = scmp.eq.s32.totalorder %s35, 0
      %p165 = por %p163, %p164
      %p166 = scmp.ne.s32.totalorder %s158, %s160
      %p167 = scmp.eq.s32.totalorder %s40, 1
      %p168 = por %p166, %p167
      %p169 = scmp.ne.s32.totalorder %s160, %s161
      %p170 = scmp.eq.s32.totalorder %s40, 0
      %p171 = por %p169, %p170
      %p172 = scmp.ne.s32.totalorder %s160, %s161
      %p173 = scmp.eq.s32.totalorder %s41, 1
      %p174 = por %p172, %p173
      %p176 = scmp.ne.s32.totalorder %s161, %s175
      %p177 = scmp.eq.s32.totalorder %s41, 0
      %p178 = por %p176, %p177
      %s180 = sadd.s32 %s179, 1
      %p183 = scmp.eq.s32.totalorder %s35, 1
      %p184 = scmp.ne.s32.totalorder %s179, %s181
      %p185 = scmp.eq.s32.totalorder %s35, 0
      %p186 = por %p184, %p185
      %p187 = scmp.ne.s32.totalorder %s179, %s181
      %p188 = scmp.eq.s32.totalorder %s40, 1
      %p189 = por %p187, %p188
      %p190 = scmp.ne.s32.totalorder %s181, %s182
      %p191 = scmp.eq.s32.totalorder %s40, 0
      %p192 = por %p190, %p191
      %p193 = scmp.ne.s32.totalorder %s181, %s182
      %p194 = scmp.eq.s32.totalorder %s41, 1
      %p195 = por %p193, %p194
      %p197 = scmp.ne.s32.totalorder %s182, %s196
      %p198 = scmp.eq.s32.totalorder %s41, 0
      %p199 = por %p197, %p198
      %s201 = sadd.s32 %s200, 1
      %p204 = scmp.eq.s32.totalorder %s35, 1
      %p205 = scmp.ne.s32.totalorder %s200, %s202
      %p206 = scmp.eq.s32.totalorder %s35, 0
      %p207 = por %p205, %p206
      %p208 = scmp.ne.s32.totalorder %s200, %s202
      %p209 = scmp.eq.s32.totalorder %s40, 1
      %p210 = por %p208, %p209
      %p211 = scmp.ne.s32.totalorder %s202, %s203
      %p212 = scmp.eq.s32.totalorder %s40, 0
      %p213 = por %p211, %p212
      %p214 = scmp.ne.s32.totalorder %s202, %s203
      %p215 = scmp.eq.s32.totalorder %s41, 1
      %p216 = por %p214, %p215
      %p218 = scmp.ne.s32.totalorder %s203, %s217
      %p219 = scmp.eq.s32.totalorder %s41, 0
      %p220 = por %p218, %p219
      %s222 = sadd.s32 %s221, 1
      %p225 = scmp.eq.s32.totalorder %s35, 1
      %p226 = scmp.ne.s32.totalorder %s221, %s223
      %p227 = scmp.eq.s32.totalorder %s35, 0
      %p228 = por %p226, %p227
      %p229 = scmp.ne.s32.totalorder %s221, %s223
      %p230 = scmp.eq.s32.totalorder %s40, 1
      %p231 = por %p229, %p230
      %p232 = scmp.ne.s32.totalorder %s223, %s224
      %p233 = scmp.eq.s32.totalorder %s40, 0
      %p234 = por %p232, %p233
      %p235 = scmp.ne.s32.totalorder %s223, %s224
      %p236 = scmp.eq.s32.totalorder %s41, 1
      %p237 = por %p235, %p236
      %p239 = scmp.ne.s32.totalorder %s224, %s238
      %p240 = scmp.eq.s32.totalorder %s41, 0
      %p241 = por %p239, %p240
      %s243 = sadd.s32 %s242, 1
      %p246 = scmp.eq.s32.totalorder %s35, 1
      %p247 = scmp.ne.s32.totalorder %s242, %s244
      %p248 = scmp.eq.s32.totalorder %s35, 0
      %p249 = por %p247, %p248
      %p250 = scmp.ne.s32.totalorder %s242, %s244
      %p251 = scmp.eq.s32.totalorder %s40, 1
      %p252 = por %p250, %p251
      %p253 = scmp.ne.s32.totalorder %s244, %s245
      %p254 = scmp.eq.s32.totalorder %s40, 0
      %p255 = por %p253, %p254
      %p256 = scmp.ne.s32.totalorder %s244, %s245
      %p257 = scmp.eq.s32.totalorder %s41, 1
      %p258 = por %p256, %p257
      %p260 = scmp.ne.s32.totalorder %s245, %s259
      %p261 = scmp.eq.s32.totalorder %s41, 0
      %p262 = por %p260, %p261
      %s264 = sadd.s32 %s263, 1
      %p267 = scmp.eq.s32.totalorder %s35, 1
      %p268 = scmp.ne.s32.totalorder %s263, %s265
      %p269 = scmp.eq.s32.totalorder %s35, 0
      %p270 = por %p268, %p269
      %p271 = scmp.ne.s32.totalorder %s263, %s265
      %p272 = scmp.eq.s32.totalorder %s40, 1
      %p273 = por %p271, %p272
      %p274 = scmp.ne.s32.totalorder %s265, %s266
      %p275 = scmp.eq.s32.totalorder %s40, 0
      %p276 = por %p274, %p275
      %p277 = scmp.ne.s32.totalorder %s265, %s266
      %p278 = scmp.eq.s32.totalorder %s41, 1
      %p279 = por %p277, %p278
      %p281 = scmp.ne.s32.totalorder %s266, %s280
      %p282 = scmp.eq.s32.totalorder %s41, 0
      %p283 = por %p281, %p282
      %s285 = sadd.s32 %s284, 1
      %p288 = scmp.eq.s32.totalorder %s35, 1
      %p289 = scmp.ne.s32.totalorder %s284, %s286
      %p290 = scmp.eq.s32.totalorder %s35, 0
      %p291 = por %p289, %p290
      %p292 = scmp.ne.s32.totalorder %s284, %s286
      %p293 = scmp.eq.s32.totalorder %s40, 1
      %p294 = por %p292, %p293
      %p295 = scmp.ne.s32.totalorder %s286, %s287
      %p296 = scmp.eq.s32.totalorder %s40, 0
      %p297 = por %p295, %p296
      %p298 = scmp.ne.s32.totalorder %s286, %s287
      %p299 = scmp.eq.s32.totalorder %s41, 1
      %p300 = por %p298, %p299
      %p302 = scmp.ne.s32.totalorder %s287, %s301
      %p303 = scmp.eq.s32.totalorder %s41, 0
      %p304 = por %p302, %p303
      %s306 = sadd.s32 %s305, 1
      %p309 = scmp.eq.s32.totalorder %s35, 1
      %p310 = scmp.ne.s32.totalorder %s305, %s307
      %p311 = scmp.eq.s32.totalorder %s35, 0
      %p312 = por %p310, %p311
      %p313 = scmp.ne.s32.totalorder %s305, %s307
      %p314 = scmp.eq.s32.totalorder %s40, 1
      %p315 = por %p313, %p314
      %p316 = scmp.ne.s32.totalorder %s307, %s308
      %p317 = scmp.eq.s32.totalorder %s40, 0
      %p318 = por %p316, %p317
      %p319 = scmp.ne.s32.totalorder %s307, %s308
      %p320 = scmp.eq.s32.totalorder %s41, 1
      %p321 = por %p319, %p320
      %p323 = scmp.ne.s32.totalorder %s308, %s322
      %p324 = scmp.eq.s32.totalorder %s41, 0
      %p325 = por %p323, %p324
      %s327 = sadd.s32 %s326, 1
      %p330 = scmp.eq.s32.totalorder %s35, 1
      %p331 = scmp.ne.s32.totalorder %s326, %s328
      %p332 = scmp.eq.s32.totalorder %s35, 0
      %p333 = por %p331, %p332
      %p334 = scmp.ne.s32.totalorder %s326, %s328
      %p335 = scmp.eq.s32.totalorder %s40, 1
      %p336 = por %p334, %p335
      %p337 = scmp.ne.s32.totalorder %s328, %s329
      %p338 = scmp.eq.s32.totalorder %s40, 0
      %p339 = por %p337, %p338
      %p340 = scmp.ne.s32.totalorder %s328, %s329
      %p341 = scmp.eq.s32.totalorder %s41, 1
      %p342 = por %p340, %p341
      %p344 = scmp.ne.s32.totalorder %s329, %s343
      %p345 = scmp.eq.s32.totalorder %s41, 0
      %p346 = por %p344, %p345
      %s348 = sadd.s32 %s347, 1
      %p351 = scmp.eq.s32.totalorder %s35, 1
      %p352 = scmp.ne.s32.totalorder %s347, %s349
      %p353 = scmp.eq.s32.totalorder %s35, 0
      %p354 = por %p352, %p353
      %p355 = scmp.ne.s32.totalorder %s347, %s349
      %p356 = scmp.eq.s32.totalorder %s40, 1
      %p357 = por %p355, %p356
      %p358 = scmp.ne.s32.totalorder %s349, %s350
      %p359 = scmp.eq.s32.totalorder %s40, 0
      %p360 = por %p358, %p359
      %p361 = scmp.ne.s32.totalorder %s349, %s350
      %p362 = scmp.eq.s32.totalorder %s41, 1
      %p363 = por %p361, %p362
      %p365 = scmp.ne.s32.totalorder %s350, %s364
      %p366 = scmp.eq.s32.totalorder %s41, 0
      %p367 = por %p365, %p366
      %s369 = sadd.s32 %s368, 1
      %p372 = scmp.eq.s32.totalorder %s35, 1
      %p373 = scmp.ne.s32.totalorder %s368, %s370
      %p374 = scmp.eq.s32.totalorder %s35, 0
      %p375 = por %p373, %p374
      %p376 = scmp.ne.s32.totalorder %s368, %s370
      %p377 = scmp.eq.s32.totalorder %s40, 1
      %p378 = por %p376, %p377
      %p379 = scmp.ne.s32.totalorder %s370, %s371
      %p380 = scmp.eq.s32.totalorder %s40, 0
      %p381 = por %p379, %p380
      %p382 = scmp.ne.s32.totalorder %s370, %s371
      %p383 = scmp.eq.s32.totalorder %s41, 1
      %p384 = por %p382, %p383
      %p386 = scmp.ne.s32.totalorder %s371, %s385
      %p387 = scmp.eq.s32.totalorder %s41, 0
      %p388 = por %p386, %p387
      %s389 = ssub.s32 %s35, %s42
      %p390 = scmp.eq.s32.totalorder %s389, 0
      %s392 = sadd.s32 %s391, 1
      %s393 = scalar_select %p390, %s391, %s392
      %p396 = pneg %p390
      %p397 = scmp.eq.s32.totalorder %s35, 1
      %p398 = por %p396, %p397
      %p399 = scmp.ne.s32.totalorder %s391, %s394
      %p400 = scmp.eq.s32.totalorder %s35, 0
      %p401 = por %p399, %p400
      %p402 = scmp.ne.s32.totalorder %s391, %s394
      %p403 = scmp.eq.s32.totalorder %s40, 1
      %p404 = por %p402, %p403
      %p405 = scmp.ne.s32.totalorder %s394, %s395
      %p406 = scmp.eq.s32.totalorder %s40, 0
      %p407 = por %p405, %p406
      %p408 = scmp.ne.s32.totalorder %s394, %s395
      %p409 = scmp.eq.s32.totalorder %s41, 1
      %p410 = por %p408, %p409
      %p412 = scmp.ne.s32.totalorder %s395, %s411
      %p413 = scmp.eq.s32.totalorder %s41, 0
      %p414 = por %p412, %p413
      %p415 = scmp.le.s32.totalorder 1, %s35
      %p416 = scmp.lt.s32.totalorder %s35, 3
      %p417 = pnand %p415, %p416
      %p418 = pneg %p417
      // Predicated region
      $region9: #{tpu_custom_call.1} parent=5 // pred_check
        _
      $region10: #{tpu_custom_call.1} parent=5 // pred_check_branch
        %420 = sbr.rel (%p417) target = $region12
      $region11: #{tpu_custom_call.1} parent=5 // pred_region
        %s421 = ssub.s32 %s35, 1
        // Predicated region
        $region13: #{tpu_custom_call.1} parent=11 // pred_check
          %p422 = pneg %p108
        $region14: #{tpu_custom_call.1} parent=11 // pred_check_branch
          %424 = sbr.rel (%p422) target = $region16
        $region15: #{tpu_custom_call.1} parent=11 // pred_region
          _
        $region16: #{tpu_custom_call.1} parent=11 // pred_fallthru
          _
        // Predicated region
        $region17: #{tpu_custom_call.1} parent=11 // pred_check
          %p425 = pneg %p129
        $region18: #{tpu_custom_call.1} parent=11 // pred_check_branch
          %427 = sbr.rel (%p425) target = $region20
        $region19: #{tpu_custom_call.1} parent=11 // pred_region
          %s429 = ssub.s32 512, 512
          %430 = vsyncadd [#allocation7], %s429
          %s431 = sshll.u32 [#allocation8], 4
          %s432 = int_to_ptr.vmem [resolvable:$true] %s431
          %437 = dma.hbm_to_vmem [thread:$0]  %s3, 512, %s432, [#allocation7], 128, 128, 8
        $region20: #{tpu_custom_call.1} parent=11 // pred_fallthru
          _
        // Predicated region
        $region21: #{tpu_custom_call.1} parent=11 // pred_check
          %p438 = pneg %p150
        $region22: #{tpu_custom_call.1} parent=11 // pred_check_branch
          %440 = sbr.rel (%p438) target = $region24
        $region23: #{tpu_custom_call.1} parent=11 // pred_region
          _
        $region24: #{tpu_custom_call.1} parent=11 // pred_fallthru
          _
        // Predicated region
        $region25: #{tpu_custom_call.1} parent=11 // pred_check
          %p441 = pneg %p171
        $region26: #{tpu_custom_call.1} parent=11 // pred_check_branch
          %443 = sbr.rel (%p441) target = $region28
        $region27: #{tpu_custom_call.1} parent=11 // pred_region
          _
        $region28: #{tpu_custom_call.1} parent=11 // pred_fallthru
          _
        // Predicated region
        $region29: #{tpu_custom_call.1} parent=11 // pred_check
          %p444 = pneg %p192
        $region30: #{tpu_custom_call.1} parent=11 // pred_check_branch
          %446 = sbr.rel (%p444) target = $region32
        $region31: #{tpu_custom_call.1} parent=11 // pred_region
          %s448 = ssub.s32 256, 256
          %449 = vsyncadd [#allocation10], %s448
          %s450 = sshll.u32 [#allocation9], 4
          %s451 = int_to_ptr.vmem [resolvable:$true] %s450
          %456 = dma.hbm_to_vmem [thread:$0]  %s6, 256, %s451, [#allocation10], 128, 128, 8
        $region32: #{tpu_custom_call.1} parent=11 // pred_fallthru
          _
        // Predicated region
        $region33: #{tpu_custom_call.1} parent=11 // pred_check
          %p457 = pneg %p213
        $region34: #{tpu_custom_call.1} parent=11 // pred_check_branch
          %459 = sbr.rel (%p457) target = $region36
        $region35: #{tpu_custom_call.1} parent=11 // pred_region
          %s461 = ssub.s32 256, 256
          %462 = vsyncadd [#allocation10], %s461
          %s463 = sshll.u32 [#allocation11], 4
          %s464 = int_to_ptr.vmem [resolvable:$true] %s463
          %469 = dma.hbm_to_vmem [thread:$0]  %s7, 256, %s464, [#allocation10], 128, 128, 8
        $region36: #{tpu_custom_call.1} parent=11 // pred_fallthru
          _
        // Predicated region
        $region37: #{tpu_custom_call.1} parent=11 // pred_check
          %p470 = pneg %p234
        $region38: #{tpu_custom_call.1} parent=11 // pred_check_branch
          %472 = sbr.rel (%p470) target = $region40
        $region39: #{tpu_custom_call.1} parent=11 // pred_region
          _
        $region40: #{tpu_custom_call.1} parent=11 // pred_fallthru
          _
        // Predicated region
        $region41: #{tpu_custom_call.1} parent=11 // pred_check
          %p473 = pneg %p255
        $region42: #{tpu_custom_call.1} parent=11 // pred_check_branch
          %475 = sbr.rel (%p473) target = $region44
        $region43: #{tpu_custom_call.1} parent=11 // pred_region
          %s477 = ssub.s32 3072, 3072
          %478 = vsyncadd [#allocation13], %s477
          %s479 = sshll.u32 [#allocation12], 4
          %s480 = int_to_ptr.vmem [resolvable:$true] %s479
          %485 = dma.hbm_to_vmem [thread:$0]  %s9, 3072, %s480, [#allocation13], 384, 384, 24
        $region44: #{tpu_custom_call.1} parent=11 // pred_fallthru
          _
        // Predicated region
        $region45: #{tpu_custom_call.1} parent=11 // pred_check
          %p486 = pneg %p276
        $region46: #{tpu_custom_call.1} parent=11 // pred_check_branch
          %488 = sbr.rel (%p486) target = $region48
        $region47: #{tpu_custom_call.1} parent=11 // pred_region
          _
        $region48: #{tpu_custom_call.1} parent=11 // pred_fallthru
          _
        // Predicated region
        $region49: #{tpu_custom_call.1} parent=11 // pred_check
          %p489 = pneg %p297
        $region50: #{tpu_custom_call.1} parent=11 // pred_check_branch
          %491 = sbr.rel (%p489) target = $region52
        $region51: #{tpu_custom_call.1} parent=11 // pred_region
          %s493 = ssub.s32 6144, 6144
          %494 = vsyncadd [#allocation13], %s493
          %s495 = sshll.u32 [#allocation14], 4
          %s496 = int_to_ptr.vmem [resolvable:$true] %s495
          %501 = dma.hbm_to_vmem [thread:$0]  %s11, 6144, %s496, [#allocation13], 384, 384, 24
        $region52: #{tpu_custom_call.1} parent=11 // pred_fallthru
          _
        // Predicated region
        $region53: #{tpu_custom_call.1} parent=11 // pred_check
          %p502 = pneg %p318
        $region54: #{tpu_custom_call.1} parent=11 // pred_check_branch
          %504 = sbr.rel (%p502) target = $region56
        $region55: #{tpu_custom_call.1} parent=11 // pred_region
          %s506 = ssub.s32 16, 16
          %507 = vsyncadd [#allocation16], %s506
          %s509 = sshll.u32 [#allocation15], 4
          %s510 = int_to_ptr.vmem [resolvable:$true] %s509
          %512 = dma.hbm_to_vmem [thread:$0]  %s12, 16, %s510, [#allocation16]
        $region56: #{tpu_custom_call.1} parent=11 // pred_fallthru
          _
        // Predicated region
        $region57: #{tpu_custom_call.1} parent=11 // pred_check
          %p513 = pneg %p339
        $region58: #{tpu_custom_call.1} parent=11 // pred_check_branch
          %515 = sbr.rel (%p513) target = $region60
        $region59: #{tpu_custom_call.1} parent=11 // pred_region
          _
        $region60: #{tpu_custom_call.1} parent=11 // pred_fallthru
          _
        // Predicated region
        $region61: #{tpu_custom_call.1} parent=11 // pred_check
          %p516 = pneg %p360
        $region62: #{tpu_custom_call.1} parent=11 // pred_check_branch
          %518 = sbr.rel (%p516) target = $region64
        $region63: #{tpu_custom_call.1} parent=11 // pred_region
          %s520 = ssub.s32 256, 256
          %521 = vsyncadd [#allocation16], %s520
          %s522 = sshll.u32 [#allocation17], 4
          %s523 = int_to_ptr.vmem [resolvable:$true] %s522
          %528 = dma.hbm_to_vmem [thread:$0]  %s14, 256, %s523, [#allocation16], 128, 128, 8
        $region64: #{tpu_custom_call.1} parent=11 // pred_fallthru
          _
        // Predicated region
        $region65: #{tpu_custom_call.1} parent=11 // pred_check
          %p529 = pneg %p381
        $region66: #{tpu_custom_call.1} parent=11 // pred_check_branch
          %531 = sbr.rel (%p529) target = $region68
        $region67: #{tpu_custom_call.1} parent=11 // pred_region
          _
        $region68: #{tpu_custom_call.1} parent=11 // pred_fallthru
          _
      $region12: #{tpu_custom_call.1} parent=5 // pred_fallthru
        _
      %p532 = scmp.lt.s32.totalorder %s35, 2
      // Predicated region
      $region69: #{tpu_custom_call.1} parent=5 // pred_check
        %p533 = pneg %p532
      $region70: #{tpu_custom_call.1} parent=5 // pred_check_branch
        %535 = sbr.rel (%p533) target = $region72
      $region71: #{tpu_custom_call.1} parent=5 // pred_region
        // Predicated region
        $region73: #{tpu_custom_call.1} parent=71 // pred_check
          %p536 = pneg %p55
        $region74: #{tpu_custom_call.1} parent=71 // pred_check_branch
          %538 = sbr.rel (%p536) target = $region76
        $region75: #{tpu_custom_call.1} parent=71 // pred_region
          %s539 = sand.u32 %s45, 1
          %s540 = scalar_lea.sflag [#allocation4], %s539
          %s541 = sand.u32 %s45, 1
          %s542 = smul.addr %s541, 8
          %s543 = scalar_lea.vmem [#allocation3], %s542
          %s545 = ssub.s32 128, 128
          %546 = vsyncadd %s540, %s545
          %s547 = smul.addr %s35, 128
          %s548 = scalar_lea.hbm %s0, %s547
          %s550 = sshll.u32 %s543, 4
          %s551 = int_to_ptr.vmem [resolvable:$true] %s550
          %553 = dma.hbm_to_vmem [thread:$0]  %s548, 128, %s551, %s540
        $region76: #{tpu_custom_call.1} parent=71 // pred_fallthru
          _
        // Predicated region
        $region77: #{tpu_custom_call.1} parent=71 // pred_check
          %p554 = pneg %p81
        $region78: #{tpu_custom_call.1} parent=71 // pred_check_branch
          %556 = sbr.rel (%p554) target = $region80
        $region79: #{tpu_custom_call.1} parent=71 // pred_region
          %s557 = sand.u32 %s35, 1
          %s558 = scalar_lea.sflag [#allocation7], %s557
          %s559 = sand.u32 %s71, 1
          %s560 = smul.addr %s559, 16
          %s561 = scalar_lea.vmem [#allocation6], %s560
          %s563 = ssub.s32 256, 256
          %564 = vsyncadd %s558, %s563
          %s565 = smul.addr %s35, 2
          %s566 = smul.addr %s565, 128
          %s567 = scalar_lea.hbm %s1, %s566
          %s568 = sshll.u32 %s561, 4
          %s569 = int_to_ptr.vmem [resolvable:$true] %s568
          %574 = dma.hbm_to_vmem [thread:$0]  %s567, 256, %s569, %s558, 128, 128, 8
        $region80: #{tpu_custom_call.1} parent=71 // pred_fallthru
          _
      $region72: #{tpu_custom_call.1} parent=5 // pred_fallthru
        _
      %p575 = scmp.le.s32.totalorder 1, %s35
      %p576 = scmp.lt.s32.totalorder %s35, 3
      %p577 = pnand %p575, %p576
      %p578 = pneg %p577
      // Predicated region
      $region81: #{tpu_custom_call.1} parent=5 // pred_check
        _
      $region82: #{tpu_custom_call.1} parent=5 // pred_check_branch
        %580 = sbr.rel (%p577) target = $region84
      $region83: #{tpu_custom_call.1} parent=5 // pred_region
        %s581 = ssub.s32 %s35, 1
        %s582 = sand.u32 %s48, 1
        %s583 = scalar_lea.sflag [#allocation4], %s582
        %s584 = sand.u32 %s48, 1
        %s585 = smul.addr %s584, 8
        %s586 = scalar_lea.vmem [#allocation3], %s585
        // Predicated region
        $region85: #{tpu_custom_call.1} parent=83 // pred_check
          %p587 = pneg %p61
        $region86: #{tpu_custom_call.1} parent=83 // pred_check_branch
          %589 = sbr.rel (%p587) target = $region88
        $region87: #{tpu_custom_call.1} parent=83 // pred_region
          %590 = dma.done %s583, 128
        $region88: #{tpu_custom_call.1} parent=83 // pred_fallthru
          _
        %s591 = sand.u32 %s40, 1
        %s592 = scalar_lea.sflag [#allocation7], %s591
        %s593 = sand.u32 %s74, 1
        %s594 = smul.addr %s593, 16
        %s595 = scalar_lea.vmem [#allocation6], %s594
        // Predicated region
        $region89: #{tpu_custom_call.1} parent=83 // pred_check
          %p596 = pneg %p87
        $region90: #{tpu_custom_call.1} parent=83 // pred_check_branch
          %598 = sbr.rel (%p596) target = $region92
        $region91: #{tpu_custom_call.1} parent=83 // pred_region
          %599 = dma.done %s592, 256
        $region92: #{tpu_custom_call.1} parent=83 // pred_fallthru
          _
        // Predicated region
        $region93: #{tpu_custom_call.1} parent=83 // pred_check
          %p600 = pneg %p129
        $region94: #{tpu_custom_call.1} parent=83 // pred_check_branch
          %602 = sbr.rel (%p600) target = $region96
        $region95: #{tpu_custom_call.1} parent=83 // pred_region
          %603 = dma.done [#allocation7], 512
        $region96: #{tpu_custom_call.1} parent=83 // pred_fallthru
          _
        // Predicated region
        $region97: #{tpu_custom_call.1} parent=83 // pred_check
          %p604 = pneg %p192
        $region98: #{tpu_custom_call.1} parent=83 // pred_check_branch
          %606 = sbr.rel (%p604) target = $region100
        $region99: #{tpu_custom_call.1} parent=83 // pred_region
          %607 = dma.done [#allocation10], 256
        $region100: #{tpu_custom_call.1} parent=83 // pred_fallthru
          _
        // Predicated region
        $region101: #{tpu_custom_call.1} parent=83 // pred_check
          %p608 = pneg %p213
        $region102: #{tpu_custom_call.1} parent=83 // pred_check_branch
          %610 = sbr.rel (%p608) target = $region104
        $region103: #{tpu_custom_call.1} parent=83 // pred_region
          %611 = dma.done [#allocation10], 256
        $region104: #{tpu_custom_call.1} parent=83 // pred_fallthru
          _
        // Predicated region
        $region105: #{tpu_custom_call.1} parent=83 // pred_check
          %p612 = pneg %p255
        $region106: #{tpu_custom_call.1} parent=83 // pred_check_branch
          %614 = sbr.rel (%p612) target = $region108
        $region107: #{tpu_custom_call.1} parent=83 // pred_region
          %615 = dma.done [#allocation13], 3072
        $region108: #{tpu_custom_call.1} parent=83 // pred_fallthru
          _
        // Predicated region
        $region109: #{tpu_custom_call.1} parent=83 // pred_check
          %p616 = pneg %p297
        $region110: #{tpu_custom_call.1} parent=83 // pred_check_branch
          %618 = sbr.rel (%p616) target = $region112
        $region111: #{tpu_custom_call.1} parent=83 // pred_region
          %619 = dma.done [#allocation13], 6144
        $region112: #{tpu_custom_call.1} parent=83 // pred_fallthru
          _
        // Predicated region
        $region113: #{tpu_custom_call.1} parent=83 // pred_check
          %p620 = pneg %p318
        $region114: #{tpu_custom_call.1} parent=83 // pred_check_branch
          %622 = sbr.rel (%p620) target = $region116
        $region115: #{tpu_custom_call.1} parent=83 // pred_region
          %623 = dma.done [#allocation16], 16
        $region116: #{tpu_custom_call.1} parent=83 // pred_fallthru
          _
        // Predicated region
        $region117: #{tpu_custom_call.1} parent=83 // pred_check
          %p624 = pneg %p360
        $region118: #{tpu_custom_call.1} parent=83 // pred_check_branch
          %626 = sbr.rel (%p624) target = $region120
        $region119: #{tpu_custom_call.1} parent=83 // pred_region
          %627 = dma.done [#allocation16], 256
        $region120: #{tpu_custom_call.1} parent=83 // pred_fallthru
          _
        %s628 = sand.u32 %s48, 1
        %s629 = scalar_lea.sflag [#allocation4], %s628
        %s630 = sand.u32 %s48, 1
        %s631 = smul.addr %s630, 8
        %s632 = scalar_lea.vmem [#allocation3], %s631
        %p633 = pneg %p61
        %p634 = pneg %p58
        %s635 = sand.u32 %s40, 1
        %s636 = scalar_lea.sflag [#allocation7], %s635
        %s637 = sand.u32 %s74, 1
        %s638 = smul.addr %s637, 16
        %s639 = scalar_lea.vmem [#allocation6], %s638
        %p640 = pneg %p87
        %p641 = pneg %p84
        %p642 = pneg %p108
        %p643 = pneg %p105
        %p644 = pneg %p129
        %p645 = pneg %p126
        %p646 = pneg %p150
        %p647 = pneg %p147
        %p648 = pneg %p171
        %p649 = pneg %p168
        %p650 = pneg %p192
        %p651 = pneg %p189
        %p652 = pneg %p213
        %p653 = pneg %p210
        %p654 = pneg %p234
        %p655 = pneg %p231
        %p656 = pneg %p255
        %p657 = pneg %p252
        %p658 = pneg %p276
        %p659 = pneg %p273
        %p660 = pneg %p297
        %p661 = pneg %p294
        %p662 = pneg %p318
        %p663 = pneg %p315
        %p664 = pneg %p339
        %p665 = pneg %p336
        %p666 = pneg %p360
        %p667 = pneg %p357
        %p668 = pneg %p381
        %p669 = pneg %p378
        %p670 = pneg %p407
        %p671 = pneg %p404
        %s672 = sand.u32 %s394, 1
        %s673 = scalar_lea.sflag [#allocation5], %s672
        %s674 = sand.u32 %s394, 1
        %s675 = smul.addr %s674, 16
        %s676 = scalar_lea.vmem [#allocation18], %s675
        %v677 = vld [vmem:[%s586] sm:$0xff]
        %v678 = vld [vmem:[%s595] sm:$0xff]
        %v679 = vld [vmem:[%s595 + $0x8] sm:$0xff]
        %v680 = vld [vmem:[%s2] sm:$0xff]
        %v681 = vld [vmem:[%s2 + $0x8] sm:$0xff]
        %vm682 = vcmask 64512
        %v684 = vsel %vm682, %v680, 0
        %v687 = vsel %vm682, %v681, 0
        %689 = vmatprep.subr.mxu0 0.0
        %690 = vmatpush1.msra.mxu0 0.0
        %691 = vmatprep.subr.mxu0 0.0
        %692 = vmatpush1.msra.mxu0 0.0
        %693 = vmatprep.subr.mxu0 0.0
        %694 = vmatpush1.msra.mxu0 0.0
        %695 = vmatprep.subr.mxu0 0.0
        %696 = vmatpush1.msra.mxu0 0.0
        %697 = vmatprep.subr.mxu0 0.0
        %698 = vmatpush1.msra.mxu0 0.0
        %699 = vmatprep.subr.mxu0 0.0
        %700 = vmatpush1.msra.mxu0 0.0
        %701 = vmatprep.subr.mxu0 0.0
        %702 = vmatpush1.msra.mxu0 0.0
        %703 = vmatprep.subr.mxu0 0.0
        %704 = vmatpush1.msra.mxu0 0.0
        %705 = vmatprep.subr.mxu0 0.0
        %706 = vmatpush1.msra.mxu0 0.0
        %707 = vmatprep.subr.mxu0 0.0
        %708 = vmatpush1.msra.mxu0 0.0
        %709 = vmatprep.subr.mxu0 0.0
        %710 = vmatpush1.msra.mxu0 0.0
        %711 = vmatprep.subr.mxu0 0.0
        %712 = vmatpush1.msra.mxu0 0.0
        %713 = vmatprep.subr.mxu0 0.0
        %714 = vmatpush1.msra.mxu0 0.0
        %715 = vmatprep.subr.mxu0 0.0
        %716 = vmatpush1.msra.mxu0 0.0
        %717 = vmatprep.subr.mxu0 0.0
        %718 = vmatpush1.msra.mxu0 0.0
        %719 = vmatprep.subr.mxu0 0.0
        %720 = vmatpush1.msra.mxu0 %v677
        %721 = vmatprep.subr.mxu0 0.0
        %722 = vmatpush2.msra.mxu0 0.0
        %723 = vmatprep.subr.mxu0 0.0
        %724 = vmatpush2.msra.mxu0 0.0
        %725 = vmatprep.subr.mxu0 0.0
        %726 = vmatpush2.msra.mxu0 0.0
        %727 = vmatprep.subr.mxu0 0.0
        %728 = vmatpush2.msra.mxu0 0.0
        %729 = vmatprep.subr.mxu0 0.0
        %730 = vmatpush2.msra.mxu0 0.0
        %731 = vmatprep.subr.mxu0 0.0
        %732 = vmatpush2.msra.mxu0 0.0
        %733 = vmatprep.subr.mxu0 0.0
        %734 = vmatpush2.msra.mxu0 0.0
        %735 = vmatprep.subr.mxu0 0.0
        %736 = vmatpush2.msra.mxu0 0.0
        %737 = vmatprep.subr.mxu0 0.0
        %738 = vmatpush2.msra.mxu0 0.0
        %739 = vmatprep.subr.mxu0 0.0
        %740 = vmatpush2.msra.mxu0 0.0
        %741 = vmatprep.subr.mxu0 0.0
        %742 = vmatpush2.msra.mxu0 0.0
        %743 = vmatprep.subr.mxu0 0.0
        %744 = vmatpush2.msra.mxu0 0.0
        %745 = vmatprep.subr.mxu0 0.0
        %746 = vmatpush2.msra.mxu0 0.0
        %747 = vmatprep.subr.mxu0 0.0
        %748 = vmatpush2.msra.mxu0 0.0
        %749 = vmatprep.subr.mxu0 0.0
        %750 = vmatpush2.msra.mxu0 0.0
        %751 = vmatprep.subr.mxu0 0.0
        %752 = vmatpush2.msra.mxu0 0.0
        %753 = vmatprep.mubr.f32.mxu0 0.0
        %754 = vmatmul.mubr.f32.gmra.mxu0 %v684
        %v755 = vpop.f32.mrf.mxu0
        %v756 = vadd.f32 0.0, %v755
        %v757 = vpop.f32.mrf.mxu0
        %758 = vmatprep.mubr.f32.mxu0 0.0
        %759 = vmatmul.mubr.f32.gmra.mxu0 %v687
        %v760 = vpop.f32.mrf.mxu0
        %v761 = vadd.f32 0.0, %v760
        %v762 = vpop.f32.mrf.mxu0
        %763 = vdwg.mxu0
        %v764 = vld [vmem:[#allocation8] sm:$0xff]
        %v765 = vld [vmem:[#allocation8 + $0x8] sm:$0xff]
        %v766 = vld [vmem:[#allocation8 + $0x10] sm:$0xff]
        %v767 = vld [vmem:[#allocation8 + $0x18] sm:$0xff]
        %vm768 = vcmask 261120
        %v770 = vsel %vm768, %v756, 0
        %v773 = vsel %vm768, %v761, 0
        %775 = vmatprep.subr.mxu0 0.0
        %776 = vmatpush1.msra.mxu0 0.0
        %777 = vmatprep.subr.mxu0 0.0
        %778 = vmatpush1.msra.mxu0 0.0
        %779 = vmatprep.subr.mxu0 0.0
        %780 = vmatpush1.msra.mxu0 0.0
        %781 = vmatprep.subr.mxu0 0.0
        %782 = vmatpush1.msra.mxu0 0.0
        %783 = vmatprep.subr.mxu0 0.0
        %784 = vmatpush1.msra.mxu0 0.0
        %785 = vmatprep.subr.mxu0 0.0
        %786 = vmatpush1.msra.mxu0 0.0
        %787 = vmatprep.subr.mxu0 0.0
        %788 = vmatpush1.msra.mxu0 0.0
        %789 = vmatprep.subr.mxu0 0.0
        %790 = vmatpush1.msra.mxu0 0.0
        %791 = vmatprep.subr.mxu0 0.0
        %792 = vmatpush1.msra.mxu0 0.0
        %793 = vmatprep.subr.mxu0 0.0
        %794 = vmatpush1.msra.mxu0 0.0
        %795 = vmatprep.subr.mxu0 0.0
        %796 = vmatpush1.msra.mxu0 0.0
        %797 = vmatprep.subr.mxu0 0.0
        %798 = vmatpush1.msra.mxu0 0.0
        %799 = vmatprep.subr.mxu0 0.0
        %800 = vmatpush1.msra.mxu0 %v767
        %801 = vmatprep.subr.mxu0 0.0
        %802 = vmatpush1.msra.mxu0 %v766
        %803 = vmatprep.subr.mxu0 0.0
        %804 = vmatpush1.msra.mxu0 %v765
        %805 = vmatprep.subr.mxu0 0.0
        %806 = vmatpush1.msra.mxu0 %v764
        %807 = vmatprep.subr.mxu0 0.0
        %808 = vmatpush2.msra.mxu0 0.0
        %809 = vmatprep.subr.mxu0 0.0
        %810 = vmatpush2.msra.mxu0 0.0
        %811 = vmatprep.subr.mxu0 0.0
        %812 = vmatpush2.msra.mxu0 0.0
        %813 = vmatprep.subr.mxu0 0.0
        %814 = vmatpush2.msra.mxu0 0.0
        %815 = vmatprep.subr.mxu0 0.0
        %816 = vmatpush2.msra.mxu0 0.0
        %817 = vmatprep.subr.mxu0 0.0
        %818 = vmatpush2.msra.mxu0 0.0
        %819 = vmatprep.subr.mxu0 0.0
        %820 = vmatpush2.msra.mxu0 0.0
        %821 = vmatprep.subr.mxu0 0.0
        %822 = vmatpush2.msra.mxu0 0.0
        %823 = vmatprep.subr.mxu0 0.0
        %824 = vmatpush2.msra.mxu0 0.0
        %825 = vmatprep.subr.mxu0 0.0
        %826 = vmatpush2.msra.mxu0 0.0
        %827 = vmatprep.subr.mxu0 0.0
        %828 = vmatpush2.msra.mxu0 0.0
        %829 = vmatprep.subr.mxu0 0.0
        %830 = vmatpush2.msra.mxu0 0.0
        %831 = vmatprep.subr.mxu0 0.0
        %832 = vmatpush2.msra.mxu0 0.0
        %833 = vmatprep.subr.mxu0 0.0
        %834 = vmatpush2.msra.mxu0 0.0
        %835 = vmatprep.subr.mxu0 0.0
        %836 = vmatpush2.msra.mxu0 0.0
        %837 = vmatprep.subr.mxu0 0.0
        %838 = vmatpush2.msra.mxu0 0.0
        %839 = vmatprep.mubr.f32.mxu0 0.0
        %840 = vmatmul.mubr.f32.gmra.mxu0 %v770
        %v841 = vpop.f32.mrf.mxu0
        %v842 = vadd.f32 0.0, %v841
        %v843 = vpop.f32.mrf.mxu0
        %844 = vmatprep.mubr.f32.mxu0 0.0
        %845 = vmatmul.mubr.f32.gmra.mxu0 %v773
        %v846 = vpop.f32.mrf.mxu0
        %v847 = vadd.f32 0.0, %v846
        %v848 = vpop.f32.mrf.mxu0
        %849 = vdwg.mxu0
        %v850 = vld [vmem:[%s4] sm:$0xff]
        %v851 = vld [vmem:[%s4 + $0x8] sm:$0xff]
        %v852 = vld [vmem:[%s4 + $0x10] sm:$0xff]
        %v853 = vld [vmem:[%s4 + $0x18] sm:$0xff]
        %v854 = vld [vmem:[%s4 + $0x20] sm:$0xff]
        %v855 = vld [vmem:[%s4 + $0x28] sm:$0xff]
        %v856 = vld [vmem:[%s4 + $0x30] sm:$0xff]
        %v857 = vld [vmem:[%s4 + $0x38] sm:$0xff]
        %v858 = vld [vmem:[%s5] sm:$0xff]
        %v859 = vld [vmem:[%s5 + $0x8] sm:$0xff]
        %v860 = vld [vmem:[%s5 + $0x10] sm:$0xff]
        %v861 = vld [vmem:[%s5 + $0x18] sm:$0xff]
        %v862 = vld [vmem:[%s5 + $0x20] sm:$0xff]
        %v863 = vld [vmem:[%s5 + $0x28] sm:$0xff]
        %v864 = vld [vmem:[%s5 + $0x30] sm:$0xff]
        %v865 = vld [vmem:[%s5 + $0x38] sm:$0xff]
        %vm866 = vcmask 523264
        %v868 = vsel %vm866, %v678, 0
        %v871 = vsel %vm866, %v679, 0
        %873 = vmatprep.subr.mxu0 0.0
        %874 = vmatpush1.msra.mxu0 0.0
        %875 = vmatprep.subr.mxu0 0.0
        %876 = vmatpush1.msra.mxu0 0.0
        %877 = vmatprep.subr.mxu0 0.0
        %878 = vmatpush1.msra.mxu0 0.0
        %879 = vmatprep.subr.mxu0 0.0
        %880 = vmatpush1.msra.mxu0 0.0
        %881 = vmatprep.subr.mxu0 0.0
        %882 = vmatpush1.msra.mxu0 0.0
        %883 = vmatprep.subr.mxu0 0.0
        %884 = vmatpush1.msra.mxu0 0.0
        %885 = vmatprep.subr.mxu0 0.0
        %886 = vmatpush1.msra.mxu0 0.0
        %887 = vmatprep.subr.mxu0 0.0
        %888 = vmatpush1.msra.mxu0 0.0
        %889 = vmatprep.subr.mxu0 0.0
        %890 = vmatpush1.msra.mxu0 %v865
        %891 = vmatprep.subr.mxu0 0.0
        %892 = vmatpush1.msra.mxu0 %v864
        %893 = vmatprep.subr.mxu0 0.0
        %894 = vmatpush1.msra.mxu0 %v863
        %895 = vmatprep.subr.mxu0 0.0
        %896 = vmatpush1.msra.mxu0 %v862
        %897 = vmatprep.subr.mxu0 0.0
        %898 = vmatpush1.msra.mxu0 %v861
        %899 = vmatprep.subr.mxu0 0.0
        %900 = vmatpush1.msra.mxu0 %v860
        %901 = vmatprep.subr.mxu0 0.0
        %902 = vmatpush1.msra.mxu0 %v859
        %903 = vmatprep.subr.mxu0 0.0
        %904 = vmatpush1.msra.mxu0 %v858
        %905 = vmatprep.subr.mxu0 0.0
        %906 = vmatpush2.msra.mxu0 0.0
        %907 = vmatprep.subr.mxu0 0.0
        %908 = vmatpush2.msra.mxu0 0.0
        %909 = vmatprep.subr.mxu0 0.0
        %910 = vmatpush2.msra.mxu0 0.0
        %911 = vmatprep.subr.mxu0 0.0
        %912 = vmatpush2.msra.mxu0 0.0
        %913 = vmatprep.subr.mxu0 0.0
        %914 = vmatpush2.msra.mxu0 0.0
        %915 = vmatprep.subr.mxu0 0.0
        %916 = vmatpush2.msra.mxu0 0.0
        %917 = vmatprep.subr.mxu0 0.0
        %918 = vmatpush2.msra.mxu0 0.0
        %919 = vmatprep.subr.mxu0 0.0
        %920 = vmatpush2.msra.mxu0 0.0
        %921 = vmatprep.subr.mxu0 0.0
        %922 = vmatpush2.msra.mxu0 0.0
        %923 = vmatprep.subr.mxu0 0.0
        %924 = vmatpush2.msra.mxu0 0.0
        %925 = vmatprep.subr.mxu0 0.0
        %926 = vmatpush2.msra.mxu0 0.0
        %927 = vmatprep.subr.mxu0 0.0
        %928 = vmatpush2.msra.mxu0 0.0
        %929 = vmatprep.subr.mxu0 0.0
        %930 = vmatpush2.msra.mxu0 0.0
        %931 = vmatprep.subr.mxu0 0.0
        %932 = vmatpush2.msra.mxu0 0.0
        %933 = vmatprep.subr.mxu0 0.0
        %934 = vmatpush2.msra.mxu0 0.0
        %935 = vmatprep.subr.mxu0 0.0
        %936 = vmatpush2.msra.mxu0 0.0
        %937 = vmatprep.mubr.f32.mxu0 0.0
        %938 = vmatmul.mubr.f32.gmra.mxu0 %v868
        %v939 = vpop.f32.mrf.mxu0
        %v940 = vadd.f32 0.0, %v939
        %v941 = vpop.f32.mrf.mxu0
        %942 = vmatprep.mubr.f32.mxu0 0.0
        %943 = vmatmul.mubr.f32.gmra.mxu0 %v871
        %v944 = vpop.f32.mrf.mxu0
        %v945 = vadd.f32 0.0, %v944
        %v946 = vpop.f32.mrf.mxu0
        %947 = vdwg.mxu0
        %v949 = vsel %vm866, %v842, 0
        %v952 = vsel %vm866, %v847, 0
        %954 = vmatprep.subr.mxu0 0.0
        %955 = vmatpush1.msra.mxu0 0.0
        %956 = vmatprep.subr.mxu0 0.0
        %957 = vmatpush1.msra.mxu0 0.0
        %958 = vmatprep.subr.mxu0 0.0
        %959 = vmatpush1.msra.mxu0 0.0
        %960 = vmatprep.subr.mxu0 0.0
        %961 = vmatpush1.msra.mxu0 0.0
        %962 = vmatprep.subr.mxu0 0.0
        %963 = vmatpush1.msra.mxu0 0.0
        %964 = vmatprep.subr.mxu0 0.0
        %965 = vmatpush1.msra.mxu0 0.0
        %966 = vmatprep.subr.mxu0 0.0
        %967 = vmatpush1.msra.mxu0 0.0
        %968 = vmatprep.subr.mxu0 0.0
        %969 = vmatpush1.msra.mxu0 0.0
        %970 = vmatprep.subr.mxu0 0.0
        %971 = vmatpush1.msra.mxu0 %v857
        %972 = vmatprep.subr.mxu0 0.0
        %973 = vmatpush1.msra.mxu0 %v856
        %974 = vmatprep.subr.mxu0 0.0
        %975 = vmatpush1.msra.mxu0 %v855
        %976 = vmatprep.subr.mxu0 0.0
        %977 = vmatpush1.msra.mxu0 %v854
        %978 = vmatprep.subr.mxu0 0.0
        %979 = vmatpush1.msra.mxu0 %v853
        %980 = vmatprep.subr.mxu0 0.0
        %981 = vmatpush1.msra.mxu0 %v852
        %982 = vmatprep.subr.mxu0 0.0
        %983 = vmatpush1.msra.mxu0 %v851
        %984 = vmatprep.subr.mxu0 0.0
        %985 = vmatpush1.msra.mxu0 %v850
        %986 = vmatprep.subr.mxu0 0.0
        %987 = vmatpush2.msra.mxu0 0.0
        %988 = vmatprep.subr.mxu0 0.0
        %989 = vmatpush2.msra.mxu0 0.0
        %990 = vmatprep.subr.mxu0 0.0
        %991 = vmatpush2.msra.mxu0 0.0
        %992 = vmatprep.subr.mxu0 0.0
        %993 = vmatpush2.msra.mxu0 0.0
        %994 = vmatprep.subr.mxu0 0.0
        %995 = vmatpush2.msra.mxu0 0.0
        %996 = vmatprep.subr.mxu0 0.0
        %997 = vmatpush2.msra.mxu0 0.0
        %998 = vmatprep.subr.mxu0 0.0
        %999 = vmatpush2.msra.mxu0 0.0
        %1000 = vmatprep.subr.mxu0 0.0
        %1001 = vmatpush2.msra.mxu0 0.0
        %1002 = vmatprep.subr.mxu0 0.0
        %1003 = vmatpush2.msra.mxu0 0.0
        %1004 = vmatprep.subr.mxu0 0.0
        %1005 = vmatpush2.msra.mxu0 0.0
        %1006 = vmatprep.subr.mxu0 0.0
        %1007 = vmatpush2.msra.mxu0 0.0
        %1008 = vmatprep.subr.mxu0 0.0
        %1009 = vmatpush2.msra.mxu0 0.0
        %1010 = vmatprep.subr.mxu0 0.0
        %1011 = vmatpush2.msra.mxu0 0.0
        %1012 = vmatprep.subr.mxu0 0.0
        %1013 = vmatpush2.msra.mxu0 0.0
        %1014 = vmatprep.subr.mxu0 0.0
        %1015 = vmatpush2.msra.mxu0 0.0
        %1016 = vmatprep.subr.mxu0 0.0
        %1017 = vmatpush2.msra.mxu0 0.0
        %1018 = vmatprep.mubr.f32.mxu0 0.0
        %1019 = vmatmul.mubr.f32.gmra.mxu0 %v949
        %v1020 = vpop.f32.mrf.mxu0
        %v1021 = vadd.f32 %v940, %v1020
        %v1022 = vpop.f32.mrf.mxu0
        %1023 = vmatprep.mubr.f32.mxu0 0.0
        %1024 = vmatmul.mubr.f32.gmra.mxu0 %v952
        %v1025 = vpop.f32.mrf.mxu0
        %v1026 = vadd.f32 %v945, %v1025
        %v1027 = vpop.f32.mrf.mxu0
        %1028 = vdwg.mxu0
        %s1029 = sld [smem:[#allocation2]]
        %v1030 = vstv %s1029
        %v1031 = vadd.f32 %v1021, %v1030
        %v1032 = vadd.f32 %v1026, %v1030
        %v1033 = vxor.u32 %v1031, 2147483648
        %v1034 = vxor.u32 %v1032, 2147483648
        %v1035 = vmul.f32 %v1033, 1.442695
        %v1036 = vpow.pop %v1035
        %v1037 = vmul.f32 %v1034, 1.442695
        %v1038 = vpow.pop %v1037
        %v1039 = vadd.f32 %v1036, 1.0
        %v1040 = vadd.f32 %v1038, 1.0
        %v1041 = vrcp.pop %v1039
        %v1042 = vmul.f32 1.0, %v1041
        %v1043 = vrcp.pop %v1040
        %v1044 = vmul.f32 1.0, %v1043
        %v1045 = vld [vmem:[#allocation9] sm:$0xff]
        %v1046 = vld [vmem:[#allocation9 + $0x8] sm:$0xff]
        %vm1047 = vcmask 130048
        %v1049 = vsel %vm1047, %v1042, 0
        %v1052 = vsel %vm1047, %v1044, 0
        %1054 = vmatprep.subr.mxu0 0.0
        %1055 = vmatpush1.msra.mxu0 0.0
        %1056 = vmatprep.subr.mxu0 0.0
        %1057 = vmatpush1.msra.mxu0 0.0
        %1058 = vmatprep.subr.mxu0 0.0
        %1059 = vmatpush1.msra.mxu0 0.0
        %1060 = vmatprep.subr.mxu0 0.0
        %1061 = vmatpush1.msra.mxu0 0.0
        %1062 = vmatprep.subr.mxu0 0.0
        %1063 = vmatpush1.msra.mxu0 0.0
        %1064 = vmatprep.subr.mxu0 0.0
        %1065 = vmatpush1.msra.mxu0 0.0
        %1066 = vmatprep.subr.mxu0 0.0
        %1067 = vmatpush1.msra.mxu0 0.0
        %1068 = vmatprep.subr.mxu0 0.0
        %1069 = vmatpush1.msra.mxu0 0.0
        %1070 = vmatprep.subr.mxu0 0.0
        %1071 = vmatpush1.msra.mxu0 0.0
        %1072 = vmatprep.subr.mxu0 0.0
        %1073 = vmatpush1.msra.mxu0 0.0
        %1074 = vmatprep.subr.mxu0 0.0
        %1075 = vmatpush1.msra.mxu0 0.0
        %1076 = vmatprep.subr.mxu0 0.0
        %1077 = vmatpush1.msra.mxu0 0.0
        %1078 = vmatprep.subr.mxu0 0.0
        %1079 = vmatpush1.msra.mxu0 0.0
        %1080 = vmatprep.subr.mxu0 0.0
        %1081 = vmatpush1.msra.mxu0 0.0
        %1082 = vmatprep.subr.mxu0 0.0
        %1083 = vmatpush1.msra.mxu0 %v1046
        %1084 = vmatprep.subr.mxu0 0.0
        %1085 = vmatpush1.msra.mxu0 %v1045
        %1086 = vmatprep.subr.mxu0 0.0
        %1087 = vmatpush2.msra.mxu0 0.0
        %1088 = vmatprep.subr.mxu0 0.0
        %1089 = vmatpush2.msra.mxu0 0.0
        %1090 = vmatprep.subr.mxu0 0.0
        %1091 = vmatpush2.msra.mxu0 0.0
        %1092 = vmatprep.subr.mxu0 0.0
        %1093 = vmatpush2.msra.mxu0 0.0
        %1094 = vmatprep.subr.mxu0 0.0
        %1095 = vmatpush2.msra.mxu0 0.0
        %1096 = vmatprep.subr.mxu0 0.0
        %1097 = vmatpush2.msra.mxu0 0.0
        %1098 = vmatprep.subr.mxu0 0.0
        %1099 = vmatpush2.msra.mxu0 0.0
        %1100 = vmatprep.subr.mxu0 0.0
        %1101 = vmatpush2.msra.mxu0 0.0
        %1102 = vmatprep.subr.mxu0 0.0
        %1103 = vmatpush2.msra.mxu0 0.0
        %1104 = vmatprep.subr.mxu0 0.0
        %1105 = vmatpush2.msra.mxu0 0.0
        %1106 = vmatprep.subr.mxu0 0.0
        %1107 = vmatpush2.msra.mxu0 0.0
        %1108 = vmatprep.subr.mxu0 0.0
        %1109 = vmatpush2.msra.mxu0 0.0
        %1110 = vmatprep.subr.mxu0 0.0
        %1111 = vmatpush2.msra.mxu0 0.0
        %1112 = vmatprep.subr.mxu0 0.0
        %1113 = vmatpush2.msra.mxu0 0.0
        %1114 = vmatprep.subr.mxu0 0.0
        %1115 = vmatpush2.msra.mxu0 0.0
        %1116 = vmatprep.subr.mxu0 0.0
        %1117 = vmatpush2.msra.mxu0 0.0
        %1118 = vmatprep.mubr.f32.mxu0 0.0
        %1119 = vmatmul.mubr.f32.gmra.mxu0 %v1049
        %v1120 = vpop.f32.mrf.mxu0
        %v1121 = vadd.f32 0.0, %v1120
        %v1122 = vpop.f32.mrf.mxu0
        %1123 = vmatprep.mubr.f32.mxu0 0.0
        %1124 = vmatmul.mubr.f32.gmra.mxu0 %v1052
        %v1125 = vpop.f32.mrf.mxu0
        %v1126 = vadd.f32 0.0, %v1125
        %v1127 = vpop.f32.mrf.mxu0
        %1128 = vdwg.mxu0
        %v1129 = vmul.f32 %v842, %v1121
        %v1130 = vmul.f32 %v847, %v1126
        %v1131 = vld [vmem:[#allocation11] sm:$0xff]
        %v1132 = vld [vmem:[#allocation11 + $0x8] sm:$0xff]
        %1133 = vmatprep.subr.mxu0 0.0
        %1134 = vmatpush1.msra.mxu0 0.0
        %1135 = vmatprep.subr.mxu0 0.0
        %1136 = vmatpush1.msra.mxu0 0.0
        %1137 = vmatprep.subr.mxu0 0.0
        %1138 = vmatpush1.msra.mxu0 0.0
        %1139 = vmatprep.subr.mxu0 0.0
        %1140 = vmatpush1.msra.mxu0 0.0
        %1141 = vmatprep.subr.mxu0 0.0
        %1142 = vmatpush1.msra.mxu0 0.0
        %1143 = vmatprep.subr.mxu0 0.0
        %1144 = vmatpush1.msra.mxu0 0.0
        %1145 = vmatprep.subr.mxu0 0.0
        %1146 = vmatpush1.msra.mxu0 0.0
        %1147 = vmatprep.subr.mxu0 0.0
        %1148 = vmatpush1.msra.mxu0 0.0
        %1149 = vmatprep.subr.mxu0 0.0
        %1150 = vmatpush1.msra.mxu0 0.0
        %1151 = vmatprep.subr.mxu0 0.0
        %1152 = vmatpush1.msra.mxu0 0.0
        %1153 = vmatprep.subr.mxu0 0.0
        %1154 = vmatpush1.msra.mxu0 0.0
        %1155 = vmatprep.subr.mxu0 0.0
        %1156 = vmatpush1.msra.mxu0 0.0
        %1157 = vmatprep.subr.mxu0 0.0
        %1158 = vmatpush1.msra.mxu0 0.0
        %1159 = vmatprep.subr.mxu0 0.0
        %1160 = vmatpush1.msra.mxu0 0.0
        %1161 = vmatprep.subr.mxu0 0.0
        %1162 = vmatpush1.msra.mxu0 %v1132
        %1163 = vmatprep.subr.mxu0 0.0
        %1164 = vmatpush1.msra.mxu0 %v1131
        %1165 = vmatprep.subr.mxu0 0.0
        %1166 = vmatpush2.msra.mxu0 0.0
        %1167 = vmatprep.subr.mxu0 0.0
        %1168 = vmatpush2.msra.mxu0 0.0
        %1169 = vmatprep.subr.mxu0 0.0
        %1170 = vmatpush2.msra.mxu0 0.0
        %1171 = vmatprep.subr.mxu0 0.0
        %1172 = vmatpush2.msra.mxu0 0.0
        %1173 = vmatprep.subr.mxu0 0.0
        %1174 = vmatpush2.msra.mxu0 0.0
        %1175 = vmatprep.subr.mxu0 0.0
        %1176 = vmatpush2.msra.mxu0 0.0
        %1177 = vmatprep.subr.mxu0 0.0
        %1178 = vmatpush2.msra.mxu0 0.0
        %1179 = vmatprep.subr.mxu0 0.0
        %1180 = vmatpush2.msra.mxu0 0.0
        %1181 = vmatprep.subr.mxu0 0.0
        %1182 = vmatpush2.msra.mxu0 0.0
        %1183 = vmatprep.subr.mxu0 0.0
        %1184 = vmatpush2.msra.mxu0 0.0
        %1185 = vmatprep.subr.mxu0 0.0
        %1186 = vmatpush2.msra.mxu0 0.0
        %1187 = vmatprep.subr.mxu0 0.0
        %1188 = vmatpush2.msra.mxu0 0.0
        %1189 = vmatprep.subr.mxu0 0.0
        %1190 = vmatpush2.msra.mxu0 0.0
        %1191 = vmatprep.subr.mxu0 0.0
        %1192 = vmatpush2.msra.mxu0 0.0
        %1193 = vmatprep.subr.mxu0 0.0
        %1194 = vmatpush2.msra.mxu0 0.0
        %1195 = vmatprep.subr.mxu0 0.0
        %1196 = vmatpush2.msra.mxu0 0.0
        %1197 = vmatprep.mubr.f32.mxu0 0.0
        %1198 = vmatmul.mubr.f32.gmra.mxu0 %v1049
        %v1199 = vpop.f32.mrf.mxu0
        %v1200 = vadd.f32 0.0, %v1199
        %v1201 = vpop.f32.mrf.mxu0
        %1202 = vmatprep.mubr.f32.mxu0 0.0
        %1203 = vmatmul.mubr.f32.gmra.mxu0 %v1052
        %v1204 = vpop.f32.mrf.mxu0
        %v1205 = vadd.f32 0.0, %v1204
        %v1206 = vpop.f32.mrf.mxu0
        %1207 = vdwg.mxu0
        %v1208 = vmul.f32 %v678, %v1200
        %v1209 = vmul.f32 %v679, %v1205
        %v1210 = vld [vmem:[%s8] sm:$0xff]
        %v1211 = vld [vmem:[%s8 + $0x8] sm:$0xff]
        %v1212 = vld [vmem:[%s8 + $0x10] sm:$0xff]
        %v1213 = vld [vmem:[%s8 + $0x18] sm:$0xff]
        %v1214 = vld [vmem:[%s8 + $0x20] sm:$0xff]
        %v1215 = vld [vmem:[%s8 + $0x28] sm:$0xff]
        %v1216 = vld [vmem:[%s8 + $0x30] sm:$0xff]
        %v1217 = vld [vmem:[%s8 + $0x38] sm:$0xff]
        %v1218 = vld [vmem:[%s8 + $0x40] sm:$0xff]
        %v1219 = vld [vmem:[%s8 + $0x48] sm:$0xff]
        %v1220 = vld [vmem:[%s8 + $0x50] sm:$0xff]
        %v1221 = vld [vmem:[%s8 + $0x58] sm:$0xff]
        %v1222 = vld [vmem:[%s8 + $0x60] sm:$0xff]
        %v1223 = vld [vmem:[%s8 + $0x68] sm:$0xff]
        %v1224 = vld [vmem:[%s8 + $0x70] sm:$0xff]
        %v1225 = vld [vmem:[%s8 + $0x78] sm:$0xff]
        %v1226 = vld [vmem:[%s8 + $0x80] sm:$0xff]
        %v1227 = vld [vmem:[%s8 + $0x88] sm:$0xff]
        %v1228 = vld [vmem:[%s8 + $0x90] sm:$0xff]
        %v1229 = vld [vmem:[%s8 + $0x98] sm:$0xff]
        %v1230 = vld [vmem:[%s8 + $0xa0] sm:$0xff]
        %v1231 = vld [vmem:[%s8 + $0xa8] sm:$0xff]
        %v1232 = vld [vmem:[%s8 + $0xb0] sm:$0xff]
        %v1233 = vld [vmem:[%s8 + $0xb8] sm:$0xff]
        %v1234 = vld [vmem:[#allocation12] sm:$0xff]
        %v1235 = vld [vmem:[#allocation12 + $0x8] sm:$0xff]
        %v1236 = vld [vmem:[#allocation12 + $0x10] sm:$0xff]
        %v1237 = vld [vmem:[#allocation12 + $0x18] sm:$0xff]
        %v1238 = vld [vmem:[#allocation12 + $0x20] sm:$0xff]
        %v1239 = vld [vmem:[#allocation12 + $0x28] sm:$0xff]
        %v1240 = vld [vmem:[#allocation12 + $0x30] sm:$0xff]
        %v1241 = vld [vmem:[#allocation12 + $0x38] sm:$0xff]
        %v1242 = vld [vmem:[#allocation12 + $0x40] sm:$0xff]
        %v1243 = vld [vmem:[#allocation12 + $0x48] sm:$0xff]
        %v1244 = vld [vmem:[#allocation12 + $0x50] sm:$0xff]
        %v1245 = vld [vmem:[#allocation12 + $0x58] sm:$0xff]
        %v1246 = vld [vmem:[#allocation12 + $0x60] sm:$0xff]
        %v1247 = vld [vmem:[#allocation12 + $0x68] sm:$0xff]
        %v1248 = vld [vmem:[#allocation12 + $0x70] sm:$0xff]
        %v1249 = vld [vmem:[#allocation12 + $0x78] sm:$0xff]
        %v1250 = vld [vmem:[#allocation12 + $0x80] sm:$0xff]
        %v1251 = vld [vmem:[#allocation12 + $0x88] sm:$0xff]
        %v1252 = vld [vmem:[#allocation12 + $0x90] sm:$0xff]
        %v1253 = vld [vmem:[#allocation12 + $0x98] sm:$0xff]
        %v1254 = vld [vmem:[#allocation12 + $0xa0] sm:$0xff]
        %v1255 = vld [vmem:[#allocation12 + $0xa8] sm:$0xff]
        %v1256 = vld [vmem:[#allocation12 + $0xb0] sm:$0xff]
        %v1257 = vld [vmem:[#allocation12 + $0xb8] sm:$0xff]
        %v1259 = vsel %vm866, %v1208, 0
        %v1262 = vsel %vm866, %v1209, 0
        %1264 = vmatprep.subr.mxu0 0.0
        %1265 = vmatpush1.msra.mxu0 0.0
        %1266 = vmatprep.subr.mxu0 0.0
        %1267 = vmatpush1.msra.mxu0 0.0
        %1268 = vmatprep.subr.mxu0 0.0
        %1269 = vmatpush1.msra.mxu0 0.0
        %1270 = vmatprep.subr.mxu0 0.0
        %1271 = vmatpush1.msra.mxu0 0.0
        %1272 = vmatprep.subr.mxu0 0.0
        %1273 = vmatpush1.msra.mxu0 0.0
        %1274 = vmatprep.subr.mxu0 0.0
        %1275 = vmatpush1.msra.mxu0 0.0
        %1276 = vmatprep.subr.mxu0 0.0
        %1277 = vmatpush1.msra.mxu0 0.0
        %1278 = vmatprep.subr.mxu0 0.0
        %1279 = vmatpush1.msra.mxu0 0.0
        %1280 = vmatprep.subr.mxu0 %v1256
        %1281 = vmatpush1.msra.mxu0 %v1255
        %1282 = vmatprep.subr.mxu0 %v1253
        %1283 = vmatpush1.msra.mxu0 %v1252
        %1284 = vmatprep.subr.mxu0 %v1250
        %1285 = vmatpush1.msra.mxu0 %v1249
        %1286 = vmatprep.subr.mxu0 %v1247
        %1287 = vmatpush1.msra.mxu0 %v1246
        %1288 = vmatprep.subr.mxu0 %v1244
        %1289 = vmatpush1.msra.mxu0 %v1243
        %1290 = vmatprep.subr.mxu0 %v1241
        %1291 = vmatpush1.msra.mxu0 %v1240
        %1292 = vmatprep.subr.mxu0 %v1238
        %1293 = vmatpush1.msra.mxu0 %v1237
        %1294 = vmatprep.subr.mxu0 %v1235
        %1295 = vmatpush1.msra.mxu0 %v1234
        %1296 = vmatprep.subr.mxu0 0.0
        %1297 = vmatpush2.msra.mxu0 0.0
        %1298 = vmatprep.subr.mxu0 0.0
        %1299 = vmatpush2.msra.mxu0 0.0
        %1300 = vmatprep.subr.mxu0 0.0
        %1301 = vmatpush2.msra.mxu0 0.0
        %1302 = vmatprep.subr.mxu0 0.0
        %1303 = vmatpush2.msra.mxu0 0.0
        %1304 = vmatprep.subr.mxu0 0.0
        %1305 = vmatpush2.msra.mxu0 0.0
        %1306 = vmatprep.subr.mxu0 0.0
        %1307 = vmatpush2.msra.mxu0 0.0
        %1308 = vmatprep.subr.mxu0 0.0
        %1309 = vmatpush2.msra.mxu0 0.0
        %1310 = vmatprep.subr.mxu0 0.0
        %1311 = vmatpush2.msra.mxu0 0.0
        %1312 = vmatprep.subr.mxu0 0.0
        %1313 = vmatpush2.msra.mxu0 0.0
        %1314 = vmatprep.subr.mxu0 0.0
        %1315 = vmatpush2.msra.mxu0 0.0
        %1316 = vmatprep.subr.mxu0 0.0
        %1317 = vmatpush2.msra.mxu0 0.0
        %1318 = vmatprep.subr.mxu0 0.0
        %1319 = vmatpush2.msra.mxu0 0.0
        %1320 = vmatprep.subr.mxu0 0.0
        %1321 = vmatpush2.msra.mxu0 0.0
        %1322 = vmatprep.subr.mxu0 0.0
        %1323 = vmatpush2.msra.mxu0 0.0
        %1324 = vmatprep.subr.mxu0 0.0
        %1325 = vmatpush2.msra.mxu0 0.0
        %1326 = vmatprep.subr.mxu0 0.0
        %1327 = vmatpush2.msra.mxu0 0.0
        %1328 = vmatprep.mubr.f32.mxu0 0.0
        %1329 = vmatmul.mubr.f32.gmra.mxu0 %v1259
        %v1330 = vpop.f32.mrf.mxu0
        %v1331 = vadd.f32 0.0, %v1330
        %v1332 = vpop.f32.mrf.mxu0
        %v1333 = vadd.f32 0.0, %v1332
        %1334 = vmatprep.mubr.f32.mxu0 0.0
        %1335 = vmatmul.mubr.f32.gmra.mxu0 %v1262
        %v1336 = vpop.f32.mrf.mxu0
        %v1337 = vadd.f32 0.0, %v1336
        %v1338 = vpop.f32.mrf.mxu0
        %v1339 = vadd.f32 0.0, %v1338
        %1340 = vdwg.mxu0
        %1341 = vmatprep.subr.mxu0 0.0
        %1342 = vmatpush1.msra.mxu0 0.0
        %1343 = vmatprep.subr.mxu0 0.0
        %1344 = vmatpush1.msra.mxu0 0.0
        %1345 = vmatprep.subr.mxu0 0.0
        %1346 = vmatpush1.msra.mxu0 0.0
        %1347 = vmatprep.subr.mxu0 0.0
        %1348 = vmatpush1.msra.mxu0 0.0
        %1349 = vmatprep.subr.mxu0 0.0
        %1350 = vmatpush1.msra.mxu0 0.0
        %1351 = vmatprep.subr.mxu0 0.0
        %1352 = vmatpush1.msra.mxu0 0.0
        %1353 = vmatprep.subr.mxu0 0.0
        %1354 = vmatpush1.msra.mxu0 0.0
        %1355 = vmatprep.subr.mxu0 0.0
        %1356 = vmatpush1.msra.mxu0 0.0
        %1357 = vmatprep.subr.mxu0 0.0
        %1358 = vmatpush1.msra.mxu0 %v1257
        %1359 = vmatprep.subr.mxu0 0.0
        %1360 = vmatpush1.msra.mxu0 %v1254
        %1361 = vmatprep.subr.mxu0 0.0
        %1362 = vmatpush1.msra.mxu0 %v1251
        %1363 = vmatprep.subr.mxu0 0.0
        %1364 = vmatpush1.msra.mxu0 %v1248
        %1365 = vmatprep.subr.mxu0 0.0
        %1366 = vmatpush1.msra.mxu0 %v1245
        %1367 = vmatprep.subr.mxu0 0.0
        %1368 = vmatpush1.msra.mxu0 %v1242
        %1369 = vmatprep.subr.mxu0 0.0
        %1370 = vmatpush1.msra.mxu0 %v1239
        %1371 = vmatprep.subr.mxu0 0.0
        %1372 = vmatpush1.msra.mxu0 %v1236
        %1373 = vmatprep.subr.mxu0 0.0
        %1374 = vmatpush2.msra.mxu0 0.0
        %1375 = vmatprep.subr.mxu0 0.0
        %1376 = vmatpush2.msra.mxu0 0.0
        %1377 = vmatprep.subr.mxu0 0.0
        %1378 = vmatpush2.msra.mxu0 0.0
        %1379 = vmatprep.subr.mxu0 0.0
        %1380 = vmatpush2.msra.mxu0 0.0
        %1381 = vmatprep.subr.mxu0 0.0
        %1382 = vmatpush2.msra.mxu0 0.0
        %1383 = vmatprep.subr.mxu0 0.0
        %1384 = vmatpush2.msra.mxu0 0.0
        %1385 = vmatprep.subr.mxu0 0.0
        %1386 = vmatpush2.msra.mxu0 0.0
        %1387 = vmatprep.subr.mxu0 0.0
        %1388 = vmatpush2.msra.mxu0 0.0
        %1389 = vmatprep.subr.mxu0 0.0
        %1390 = vmatpush2.msra.mxu0 0.0
        %1391 = vmatprep.subr.mxu0 0.0
        %1392 = vmatpush2.msra.mxu0 0.0
        %1393 = vmatprep.subr.mxu0 0.0
        %1394 = vmatpush2.msra.mxu0 0.0
        %1395 = vmatprep.subr.mxu0 0.0
        %1396 = vmatpush2.msra.mxu0 0.0
        %1397 = vmatprep.subr.mxu0 0.0
        %1398 = vmatpush2.msra.mxu0 0.0
        %1399 = vmatprep.subr.mxu0 0.0
        %1400 = vmatpush2.msra.mxu0 0.0
        %1401 = vmatprep.subr.mxu0 0.0
        %1402 = vmatpush2.msra.mxu0 0.0
        %1403 = vmatprep.subr.mxu0 0.0
        %1404 = vmatpush2.msra.mxu0 0.0
        %1405 = vmatprep.mubr.f32.mxu0 0.0
        %1406 = vmatmul.mubr.f32.gmra.mxu0 %v1259
        %v1407 = vpop.f32.mrf.mxu0
        %v1408 = vadd.f32 0.0, %v1407
        %v1409 = vpop.f32.mrf.mxu0
        %1410 = vmatprep.mubr.f32.mxu0 0.0
        %1411 = vmatmul.mubr.f32.gmra.mxu0 %v1262
        %v1412 = vpop.f32.mrf.mxu0
        %v1413 = vadd.f32 0.0, %v1412
        %v1414 = vpop.f32.mrf.mxu0
        %1415 = vdwg.mxu0
        %v1417 = vsel %vm866, %v1129, 0
        %v1420 = vsel %vm866, %v1130, 0
        %1422 = vmatprep.subr.mxu0 0.0
        %1423 = vmatpush1.msra.mxu0 0.0
        %1424 = vmatprep.subr.mxu0 0.0
        %1425 = vmatpush1.msra.mxu0 0.0
        %1426 = vmatprep.subr.mxu0 0.0
        %1427 = vmatpush1.msra.mxu0 0.0
        %1428 = vmatprep.subr.mxu0 0.0
        %1429 = vmatpush1.msra.mxu0 0.0
        %1430 = vmatprep.subr.mxu0 0.0
        %1431 = vmatpush1.msra.mxu0 0.0
        %1432 = vmatprep.subr.mxu0 0.0
        %1433 = vmatpush1.msra.mxu0 0.0
        %1434 = vmatprep.subr.mxu0 0.0
        %1435 = vmatpush1.msra.mxu0 0.0
        %1436 = vmatprep.subr.mxu0 0.0
        %1437 = vmatpush1.msra.mxu0 0.0
        %1438 = vmatprep.subr.mxu0 %v1232
        %1439 = vmatpush1.msra.mxu0 %v1231
        %1440 = vmatprep.subr.mxu0 %v1229
        %1441 = vmatpush1.msra.mxu0 %v1228
        %1442 = vmatprep.subr.mxu0 %v1226
        %1443 = vmatpush1.msra.mxu0 %v1225
        %1444 = vmatprep.subr.mxu0 %v1223
        %1445 = vmatpush1.msra.mxu0 %v1222
        %1446 = vmatprep.subr.mxu0 %v1220
        %1447 = vmatpush1.msra.mxu0 %v1219
        %1448 = vmatprep.subr.mxu0 %v1217
        %1449 = vmatpush1.msra.mxu0 %v1216
        %1450 = vmatprep.subr.mxu0 %v1214
        %1451 = vmatpush1.msra.mxu0 %v1213
        %1452 = vmatprep.subr.mxu0 %v1211
        %1453 = vmatpush1.msra.mxu0 %v1210
        %1454 = vmatprep.subr.mxu0 0.0
        %1455 = vmatpush2.msra.mxu0 0.0
        %1456 = vmatprep.subr.mxu0 0.0
        %1457 = vmatpush2.msra.mxu0 0.0
        %1458 = vmatprep.subr.mxu0 0.0
        %1459 = vmatpush2.msra.mxu0 0.0
        %1460 = vmatprep.subr.mxu0 0.0
        %1461 = vmatpush2.msra.mxu0 0.0
        %1462 = vmatprep.subr.mxu0 0.0
        %1463 = vmatpush2.msra.mxu0 0.0
        %1464 = vmatprep.subr.mxu0 0.0
        %1465 = vmatpush2.msra.mxu0 0.0
        %1466 = vmatprep.subr.mxu0 0.0
        %1467 = vmatpush2.msra.mxu0 0.0
        %1468 = vmatprep.subr.mxu0 0.0
        %1469 = vmatpush2.msra.mxu0 0.0
        %1470 = vmatprep.subr.mxu0 0.0
        %1471 = vmatpush2.msra.mxu0 0.0
        %1472 = vmatprep.subr.mxu0 0.0
        %1473 = vmatpush2.msra.mxu0 0.0
        %1474 = vmatprep.subr.mxu0 0.0
        %1475 = vmatpush2.msra.mxu0 0.0
        %1476 = vmatprep.subr.mxu0 0.0
        %1477 = vmatpush2.msra.mxu0 0.0
        %1478 = vmatprep.subr.mxu0 0.0
        %1479 = vmatpush2.msra.mxu0 0.0
        %1480 = vmatprep.subr.mxu0 0.0
        %1481 = vmatpush2.msra.mxu0 0.0
        %1482 = vmatprep.subr.mxu0 0.0
        %1483 = vmatpush2.msra.mxu0 0.0
        %1484 = vmatprep.subr.mxu0 0.0
        %1485 = vmatpush2.msra.mxu0 0.0
        %1486 = vmatprep.mubr.f32.mxu0 0.0
        %1487 = vmatmul.mubr.f32.gmra.mxu0 %v1417
        %v1488 = vpop.f32.mrf.mxu0
        %v1489 = vadd.f32 %v1331, %v1488
        %v1490 = vpop.f32.mrf.mxu0
        %v1491 = vadd.f32 %v1333, %v1490
        %1492 = vmatprep.mubr.f32.mxu0 0.0
        %1493 = vmatmul.mubr.f32.gmra.mxu0 %v1420
        %v1494 = vpop.f32.mrf.mxu0
        %v1495 = vadd.f32 %v1337, %v1494
        %v1496 = vpop.f32.mrf.mxu0
        %v1497 = vadd.f32 %v1339, %v1496
        %1498 = vdwg.mxu0
        %1499 = vmatprep.subr.mxu0 0.0
        %1500 = vmatpush1.msra.mxu0 0.0
        %1501 = vmatprep.subr.mxu0 0.0
        %1502 = vmatpush1.msra.mxu0 0.0
        %1503 = vmatprep.subr.mxu0 0.0
        %1504 = vmatpush1.msra.mxu0 0.0
        %1505 = vmatprep.subr.mxu0 0.0
        %1506 = vmatpush1.msra.mxu0 0.0
        %1507 = vmatprep.subr.mxu0 0.0
        %1508 = vmatpush1.msra.mxu0 0.0
        %1509 = vmatprep.subr.mxu0 0.0
        %1510 = vmatpush1.msra.mxu0 0.0
        %1511 = vmatprep.subr.mxu0 0.0
        %1512 = vmatpush1.msra.mxu0 0.0
        %1513 = vmatprep.subr.mxu0 0.0
        %1514 = vmatpush1.msra.mxu0 0.0
        %1515 = vmatprep.subr.mxu0 0.0
        %1516 = vmatpush1.msra.mxu0 %v1233
        %1517 = vmatprep.subr.mxu0 0.0
        %1518 = vmatpush1.msra.mxu0 %v1230
        %1519 = vmatprep.subr.mxu0 0.0
        %1520 = vmatpush1.msra.mxu0 %v1227
        %1521 = vmatprep.subr.mxu0 0.0
        %1522 = vmatpush1.msra.mxu0 %v1224
        %1523 = vmatprep.subr.mxu0 0.0
        %1524 = vmatpush1.msra.mxu0 %v1221
        %1525 = vmatprep.subr.mxu0 0.0
        %1526 = vmatpush1.msra.mxu0 %v1218
        %1527 = vmatprep.subr.mxu0 0.0
        %1528 = vmatpush1.msra.mxu0 %v1215
        %1529 = vmatprep.subr.mxu0 0.0
        %1530 = vmatpush1.msra.mxu0 %v1212
        %1531 = vmatprep.subr.mxu0 0.0
        %1532 = vmatpush2.msra.mxu0 0.0
        %1533 = vmatprep.subr.mxu0 0.0
        %1534 = vmatpush2.msra.mxu0 0.0
        %1535 = vmatprep.subr.mxu0 0.0
        %1536 = vmatpush2.msra.mxu0 0.0
        %1537 = vmatprep.subr.mxu0 0.0
        %1538 = vmatpush2.msra.mxu0 0.0
        %1539 = vmatprep.subr.mxu0 0.0
        %1540 = vmatpush2.msra.mxu0 0.0
        %1541 = vmatprep.subr.mxu0 0.0
        %1542 = vmatpush2.msra.mxu0 0.0
        %1543 = vmatprep.subr.mxu0 0.0
        %1544 = vmatpush2.msra.mxu0 0.0
        %1545 = vmatprep.subr.mxu0 0.0
        %1546 = vmatpush2.msra.mxu0 0.0
        %1547 = vmatprep.subr.mxu0 0.0
        %1548 = vmatpush2.msra.mxu0 0.0
        %1549 = vmatprep.subr.mxu0 0.0
        %1550 = vmatpush2.msra.mxu0 0.0
        %1551 = vmatprep.subr.mxu0 0.0
        %1552 = vmatpush2.msra.mxu0 0.0
        %1553 = vmatprep.subr.mxu0 0.0
        %1554 = vmatpush2.msra.mxu0 0.0
        %1555 = vmatprep.subr.mxu0 0.0
        %1556 = vmatpush2.msra.mxu0 0.0
        %1557 = vmatprep.subr.mxu0 0.0
        %1558 = vmatpush2.msra.mxu0 0.0
        %1559 = vmatprep.subr.mxu0 0.0
        %1560 = vmatpush2.msra.mxu0 0.0
        %1561 = vmatprep.subr.mxu0 0.0
        %1562 = vmatpush2.msra.mxu0 0.0
        %1563 = vmatprep.mubr.f32.mxu0 0.0
        %1564 = vmatmul.mubr.f32.gmra.mxu0 %v1417
        %v1565 = vpop.f32.mrf.mxu0
        %v1566 = vadd.f32 %v1408, %v1565
        %v1567 = vpop.f32.mrf.mxu0
        %1568 = vmatprep.mubr.f32.mxu0 0.0
        %1569 = vmatmul.mubr.f32.gmra.mxu0 %v1420
        %v1570 = vpop.f32.mrf.mxu0
        %v1571 = vadd.f32 %v1413, %v1570
        %v1572 = vpop.f32.mrf.mxu0
        %1573 = vdwg.mxu0
        %v1574 = vld [vmem:[%s10] sm:$0x1]
        %v1575 = vld [vmem:[%s13] sm:$0xff]
        %v1576 = vld [vmem:[%s13 + $0x8] sm:$0xff]
        %v1578 = vsel %vm1047, %v1575, 0
        %v1581 = vsel %vm1047, %v1576, 0
        %1583 = vmatprep.subr.mxu0 0.0
        %1584 = vmatpush1.msra.mxu0 0.0
        %1585 = vmatprep.subr.mxu0 0.0
        %1586 = vmatpush1.msra.mxu0 0.0
        %1587 = vmatprep.subr.mxu0 0.0
        %1588 = vmatpush1.msra.mxu0 0.0
        %1589 = vmatprep.subr.mxu0 0.0
        %1590 = vmatpush1.msra.mxu0 0.0
        %1591 = vmatprep.subr.mxu0 0.0
        %1592 = vmatpush1.msra.mxu0 0.0
        %1593 = vmatprep.subr.mxu0 0.0
        %1594 = vmatpush1.msra.mxu0 0.0
        %1595 = vmatprep.subr.mxu0 0.0
        %1596 = vmatpush1.msra.mxu0 0.0
        %1597 = vmatprep.subr.mxu0 0.0
        %1598 = vmatpush1.msra.mxu0 0.0
        %1599 = vmatprep.subr.mxu0 0.0
        %1600 = vmatpush1.msra.mxu0 0.0
        %1601 = vmatprep.subr.mxu0 0.0
        %1602 = vmatpush1.msra.mxu0 0.0
        %1603 = vmatprep.subr.mxu0 0.0
        %1604 = vmatpush1.msra.mxu0 0.0
        %1605 = vmatprep.subr.mxu0 0.0
        %1606 = vmatpush1.msra.mxu0 0.0
        %1607 = vmatprep.subr.mxu0 0.0
        %1608 = vmatpush1.msra.mxu0 0.0
        %1609 = vmatprep.subr.mxu0 0.0
        %1610 = vmatpush1.msra.mxu0 0.0
        %1611 = vmatprep.subr.mxu0 0.0
        %1612 = vmatpush1.msra.mxu0 %v1495
        %1613 = vmatprep.subr.mxu0 0.0
        %1614 = vmatpush1.msra.mxu0 %v1489
        %1615 = vmatprep.subr.mxu0 0.0
        %1616 = vmatpush2.msra.mxu0 0.0
        %1617 = vmatprep.subr.mxu0 0.0
        %1618 = vmatpush2.msra.mxu0 0.0
        %1619 = vmatprep.subr.mxu0 0.0
        %1620 = vmatpush2.msra.mxu0 0.0
        %1621 = vmatprep.subr.mxu0 0.0
        %1622 = vmatpush2.msra.mxu0 0.0
        %1623 = vmatprep.subr.mxu0 0.0
        %1624 = vmatpush2.msra.mxu0 0.0
        %1625 = vmatprep.subr.mxu0 0.0
        %1626 = vmatpush2.msra.mxu0 0.0
        %1627 = vmatprep.subr.mxu0 0.0
        %1628 = vmatpush2.msra.mxu0 0.0
        %1629 = vmatprep.subr.mxu0 0.0
        %1630 = vmatpush2.msra.mxu0 0.0
        %1631 = vmatprep.subr.mxu0 0.0
        %1632 = vmatpush2.msra.mxu0 0.0
        %1633 = vmatprep.subr.mxu0 0.0
        %1634 = vmatpush2.msra.mxu0 0.0
        %1635 = vmatprep.subr.mxu0 0.0
        %1636 = vmatpush2.msra.mxu0 0.0
        %1637 = vmatprep.subr.mxu0 0.0
        %1638 = vmatpush2.msra.mxu0 0.0
        %1639 = vmatprep.subr.mxu0 0.0
        %1640 = vmatpush2.msra.mxu0 0.0
        %1641 = vmatprep.subr.mxu0 0.0
        %1642 = vmatpush2.msra.mxu0 0.0
        %1643 = vmatprep.subr.mxu0 0.0
        %1644 = vmatpush2.msra.mxu0 0.0
        %1645 = vmatprep.subr.mxu0 0.0
        %1646 = vmatpush2.msra.mxu0 0.0
        %1647 = vmatprep.mubr.f32.mxu0 0.0
        %1648 = vmatmul.mubr.f32.gmra.mxu0 %v1578
        %v1649 = vpop.f32.mrf.mxu0
        %v1650 = vadd.f32 0.0, %v1649
        %v1651 = vpop.f32.mrf.mxu0
        %1652 = vmatprep.mubr.f32.mxu0 0.0
        %1653 = vmatmul.mubr.f32.gmra.mxu0 %v1581
        %v1654 = vpop.f32.mrf.mxu0
        %v1655 = vadd.f32 0.0, %v1654
        %v1656 = vpop.f32.mrf.mxu0
        %1657 = vdwg.mxu0
        %v1658 = vadd.f32 %v1491, %v1650
        %v1659 = vadd.f32 %v1497, %v1655
        %v1660 = vld [vmem:[#allocation17] sm:$0xff]
        %v1661 = vld [vmem:[#allocation17 + $0x8] sm:$0xff]
        %v1663 = vsel %vm1047, %v1660, 0
        %v1666 = vsel %vm1047, %v1661, 0
        %1668 = vmatprep.subr.mxu0 0.0
        %1669 = vmatpush1.msra.mxu0 0.0
        %1670 = vmatprep.subr.mxu0 0.0
        %1671 = vmatpush1.msra.mxu0 0.0
        %1672 = vmatprep.subr.mxu0 0.0
        %1673 = vmatpush1.msra.mxu0 0.0
        %1674 = vmatprep.subr.mxu0 0.0
        %1675 = vmatpush1.msra.mxu0 0.0
        %1676 = vmatprep.subr.mxu0 0.0
        %1677 = vmatpush1.msra.mxu0 0.0
        %1678 = vmatprep.subr.mxu0 0.0
        %1679 = vmatpush1.msra.mxu0 0.0
        %1680 = vmatprep.subr.mxu0 0.0
        %1681 = vmatpush1.msra.mxu0 0.0
        %1682 = vmatprep.subr.mxu0 0.0
        %1683 = vmatpush1.msra.mxu0 0.0
        %1684 = vmatprep.subr.mxu0 0.0
        %1685 = vmatpush1.msra.mxu0 0.0
        %1686 = vmatprep.subr.mxu0 0.0
        %1687 = vmatpush1.msra.mxu0 0.0
        %1688 = vmatprep.subr.mxu0 0.0
        %1689 = vmatpush1.msra.mxu0 0.0
        %1690 = vmatprep.subr.mxu0 0.0
        %1691 = vmatpush1.msra.mxu0 0.0
        %1692 = vmatprep.subr.mxu0 0.0
        %1693 = vmatpush1.msra.mxu0 0.0
        %1694 = vmatprep.subr.mxu0 0.0
        %1695 = vmatpush1.msra.mxu0 0.0
        %1696 = vmatprep.subr.mxu0 0.0
        %1697 = vmatpush1.msra.mxu0 %v1571
        %1698 = vmatprep.subr.mxu0 0.0
        %1699 = vmatpush1.msra.mxu0 %v1566
        %1700 = vmatprep.subr.mxu0 0.0
        %1701 = vmatpush2.msra.mxu0 0.0
        %1702 = vmatprep.subr.mxu0 0.0
        %1703 = vmatpush2.msra.mxu0 0.0
        %1704 = vmatprep.subr.mxu0 0.0
        %1705 = vmatpush2.msra.mxu0 0.0
        %1706 = vmatprep.subr.mxu0 0.0
        %1707 = vmatpush2.msra.mxu0 0.0
        %1708 = vmatprep.subr.mxu0 0.0
        %1709 = vmatpush2.msra.mxu0 0.0
        %1710 = vmatprep.subr.mxu0 0.0
        %1711 = vmatpush2.msra.mxu0 0.0
        %1712 = vmatprep.subr.mxu0 0.0
        %1713 = vmatpush2.msra.mxu0 0.0
        %1714 = vmatprep.subr.mxu0 0.0
        %1715 = vmatpush2.msra.mxu0 0.0
        %1716 = vmatprep.subr.mxu0 0.0
        %1717 = vmatpush2.msra.mxu0 0.0
        %1718 = vmatprep.subr.mxu0 0.0
        %1719 = vmatpush2.msra.mxu0 0.0
        %1720 = vmatprep.subr.mxu0 0.0
        %1721 = vmatpush2.msra.mxu0 0.0
        %1722 = vmatprep.subr.mxu0 0.0
        %1723 = vmatpush2.msra.mxu0 0.0
        %1724 = vmatprep.subr.mxu0 0.0
        %1725 = vmatpush2.msra.mxu0 0.0
        %1726 = vmatprep.subr.mxu0 0.0
        %1727 = vmatpush2.msra.mxu0 0.0
        %1728 = vmatprep.subr.mxu0 0.0
        %1729 = vmatpush2.msra.mxu0 0.0
        %1730 = vmatprep.subr.mxu0 0.0
        %1731 = vmatpush2.msra.mxu0 0.0
        %1732 = vmatprep.mubr.f32.mxu0 0.0
        %1733 = vmatmul.mubr.f32.gmra.mxu0 %v1663
        %v1734 = vpop.f32.mrf.mxu0
        %v1735 = vadd.f32 0.0, %v1734
        %v1736 = vpop.f32.mrf.mxu0
        %1737 = vmatprep.mubr.f32.mxu0 0.0
        %1738 = vmatmul.mubr.f32.gmra.mxu0 %v1666
        %v1739 = vpop.f32.mrf.mxu0
        %v1740 = vadd.f32 0.0, %v1739
        %v1741 = vpop.f32.mrf.mxu0
        %1742 = vdwg.mxu0
        %v1743 = vadd.f32 %v1658, %v1735
        %v1744 = vadd.f32 %v1659, %v1740
        %v1746 = vlaneseq
        %v1747 = vshrl.u32 %v1746, 7
        %v1748 = vsub.s32 0, %v1747
        %v1749 = vrot.slane %v1574, %v1748
        %v1751 = vadd.f32 %v1743, %v1749
        %v1752 = vadd.f32 %v1744, %v1749
        %v1753 = vmax.f32 %v1751, 0.0
        %v1754 = vmax.f32 %v1752, 0.0
        %v1755 = vld [vmem:[#allocation14] sm:$0xff]
        %v1756 = vld [vmem:[#allocation14 + $0x8] sm:$0xff]
        %v1757 = vld [vmem:[#allocation14 + $0x10] sm:$0xff]
        %v1758 = vld [vmem:[#allocation14 + $0x18] sm:$0xff]
        %v1759 = vld [vmem:[#allocation14 + $0x20] sm:$0xff]
        %v1760 = vld [vmem:[#allocation14 + $0x28] sm:$0xff]
        %v1761 = vld [vmem:[#allocation14 + $0x30] sm:$0xff]
        %v1762 = vld [vmem:[#allocation14 + $0x38] sm:$0xff]
        %v1763 = vld [vmem:[#allocation14 + $0x40] sm:$0xff]
        %v1764 = vld [vmem:[#allocation14 + $0x48] sm:$0xff]
        %v1765 = vld [vmem:[#allocation14 + $0x50] sm:$0xff]
        %v1766 = vld [vmem:[#allocation14 + $0x58] sm:$0xff]
        %v1767 = vld [vmem:[#allocation14 + $0x60] sm:$0xff]
        %v1768 = vld [vmem:[#allocation14 + $0x68] sm:$0xff]
        %v1769 = vld [vmem:[#allocation14 + $0x70] sm:$0xff]
        %v1770 = vld [vmem:[#allocation14 + $0x78] sm:$0xff]
        %v1771 = vld [vmem:[#allocation14 + $0x80] sm:$0xff]
        %v1772 = vld [vmem:[#allocation14 + $0x88] sm:$0xff]
        %v1773 = vld [vmem:[#allocation14 + $0x90] sm:$0xff]
        %v1774 = vld [vmem:[#allocation14 + $0x98] sm:$0xff]
        %v1775 = vld [vmem:[#allocation14 + $0xa0] sm:$0xff]
        %v1776 = vld [vmem:[#allocation14 + $0xa8] sm:$0xff]
        %v1777 = vld [vmem:[#allocation14 + $0xb0] sm:$0xff]
        %v1778 = vld [vmem:[#allocation14 + $0xb8] sm:$0xff]
        %v1779 = vld [vmem:[#allocation14 + $0xc0] sm:$0xff]
        %v1780 = vld [vmem:[#allocation14 + $0xc8] sm:$0xff]
        %v1781 = vld [vmem:[#allocation14 + $0xd0] sm:$0xff]
        %v1782 = vld [vmem:[#allocation14 + $0xd8] sm:$0xff]
        %v1783 = vld [vmem:[#allocation14 + $0xe0] sm:$0xff]
        %v1784 = vld [vmem:[#allocation14 + $0xe8] sm:$0xff]
        %v1785 = vld [vmem:[#allocation14 + $0xf0] sm:$0xff]
        %v1786 = vld [vmem:[#allocation14 + $0xf8] sm:$0xff]
        %v1787 = vld [vmem:[#allocation14 + $0x100] sm:$0xff]
        %v1788 = vld [vmem:[#allocation14 + $0x108] sm:$0xff]
        %v1789 = vld [vmem:[#allocation14 + $0x110] sm:$0xff]
        %v1790 = vld [vmem:[#allocation14 + $0x118] sm:$0xff]
        %v1791 = vld [vmem:[#allocation14 + $0x120] sm:$0xff]
        %v1792 = vld [vmem:[#allocation14 + $0x128] sm:$0xff]
        %v1793 = vld [vmem:[#allocation14 + $0x130] sm:$0xff]
        %v1794 = vld [vmem:[#allocation14 + $0x138] sm:$0xff]
        %v1795 = vld [vmem:[#allocation14 + $0x140] sm:$0xff]
        %v1796 = vld [vmem:[#allocation14 + $0x148] sm:$0xff]
        %v1797 = vld [vmem:[#allocation14 + $0x150] sm:$0xff]
        %v1798 = vld [vmem:[#allocation14 + $0x158] sm:$0xff]
        %v1799 = vld [vmem:[#allocation14 + $0x160] sm:$0xff]
        %v1800 = vld [vmem:[#allocation14 + $0x168] sm:$0xff]
        %v1801 = vld [vmem:[#allocation14 + $0x170] sm:$0xff]
        %v1802 = vld [vmem:[#allocation14 + $0x178] sm:$0xff]
        %1803 = vmatprep.subr.mxu0 %v1801
        %1804 = vmatpush1.msra.mxu0 %v1800
        %1805 = vmatprep.subr.mxu0 %v1798
        %1806 = vmatpush1.msra.mxu0 %v1797
        %1807 = vmatprep.subr.mxu0 %v1795
        %1808 = vmatpush1.msra.mxu0 %v1794
        %1809 = vmatprep.subr.mxu0 %v1792
        %1810 = vmatpush1.msra.mxu0 %v1791
        %1811 = vmatprep.subr.mxu0 %v1789
        %1812 = vmatpush1.msra.mxu0 %v1788
        %1813 = vmatprep.subr.mxu0 %v1786
        %1814 = vmatpush1.msra.mxu0 %v1785
        %1815 = vmatprep.subr.mxu0 %v1783
        %1816 = vmatpush1.msra.mxu0 %v1782
        %1817 = vmatprep.subr.mxu0 %v1780
        %1818 = vmatpush1.msra.mxu0 %v1779
        %1819 = vmatprep.subr.mxu0 %v1777
        %1820 = vmatpush1.msra.mxu0 %v1776
        %1821 = vmatprep.subr.mxu0 %v1774
        %1822 = vmatpush1.msra.mxu0 %v1773
        %1823 = vmatprep.subr.mxu0 %v1771
        %1824 = vmatpush1.msra.mxu0 %v1770
        %1825 = vmatprep.subr.mxu0 %v1768
        %1826 = vmatpush1.msra.mxu0 %v1767
        %1827 = vmatprep.subr.mxu0 %v1765
        %1828 = vmatpush1.msra.mxu0 %v1764
        %1829 = vmatprep.subr.mxu0 %v1762
        %1830 = vmatpush1.msra.mxu0 %v1761
        %1831 = vmatprep.subr.mxu0 %v1759
        %1832 = vmatpush1.msra.mxu0 %v1758
        %1833 = vmatprep.subr.mxu0 %v1756
        %1834 = vmatpush1.msra.mxu0 %v1755
        %1835 = vmatprep.subr.mxu0 0.0
        %1836 = vmatpush2.msra.mxu0 0.0
        %1837 = vmatprep.subr.mxu0 0.0
        %1838 = vmatpush2.msra.mxu0 0.0
        %1839 = vmatprep.subr.mxu0 0.0
        %1840 = vmatpush2.msra.mxu0 0.0
        %1841 = vmatprep.subr.mxu0 0.0
        %1842 = vmatpush2.msra.mxu0 0.0
        %1843 = vmatprep.subr.mxu0 0.0
        %1844 = vmatpush2.msra.mxu0 0.0
        %1845 = vmatprep.subr.mxu0 0.0
        %1846 = vmatpush2.msra.mxu0 0.0
        %1847 = vmatprep.subr.mxu0 0.0
        %1848 = vmatpush2.msra.mxu0 0.0
        %1849 = vmatprep.subr.mxu0 0.0
        %1850 = vmatpush2.msra.mxu0 0.0
        %1851 = vmatprep.subr.mxu0 0.0
        %1852 = vmatpush2.msra.mxu0 0.0
        %1853 = vmatprep.subr.mxu0 0.0
        %1854 = vmatpush2.msra.mxu0 0.0
        %1855 = vmatprep.subr.mxu0 0.0
        %1856 = vmatpush2.msra.mxu0 0.0
        %1857 = vmatprep.subr.mxu0 0.0
        %1858 = vmatpush2.msra.mxu0 0.0
        %1859 = vmatprep.subr.mxu0 0.0
        %1860 = vmatpush2.msra.mxu0 0.0
        %1861 = vmatprep.subr.mxu0 0.0
        %1862 = vmatpush2.msra.mxu0 0.0
        %1863 = vmatprep.subr.mxu0 0.0
        %1864 = vmatpush2.msra.mxu0 0.0
        %1865 = vmatprep.subr.mxu0 0.0
        %1866 = vmatpush2.msra.mxu0 0.0
        %1867 = vmatprep.mubr.f32.mxu0 0.0
        %1868 = vmatmul.mubr.f32.gmra.mxu0 %v1753
        %v1869 = vpop.f32.mrf.mxu0
        %v1870 = vadd.f32 0.0, %v1869
        %v1871 = vpop.f32.mrf.mxu0
        %v1872 = vadd.f32 0.0, %v1871
        %1873 = vmatprep.mubr.f32.mxu0 0.0
        %1874 = vmatmul.mubr.f32.gmra.mxu0 %v1754
        %v1875 = vpop.f32.mrf.mxu0
        %v1876 = vadd.f32 0.0, %v1875
        %v1877 = vpop.f32.mrf.mxu0
        %v1878 = vadd.f32 0.0, %v1877
        %1879 = vdwg.mxu0
        %1880 = vmatprep.subr.mxu0 0.0
        %1881 = vmatpush1.msra.mxu0 %v1802
        %1882 = vmatprep.subr.mxu0 0.0
        %1883 = vmatpush1.msra.mxu0 %v1799
        %1884 = vmatprep.subr.mxu0 0.0
        %1885 = vmatpush1.msra.mxu0 %v1796
        %1886 = vmatprep.subr.mxu0 0.0
        %1887 = vmatpush1.msra.mxu0 %v1793
        %1888 = vmatprep.subr.mxu0 0.0
        %1889 = vmatpush1.msra.mxu0 %v1790
        %1890 = vmatprep.subr.mxu0 0.0
        %1891 = vmatpush1.msra.mxu0 %v1787
        %1892 = vmatprep.subr.mxu0 0.0
        %1893 = vmatpush1.msra.mxu0 %v1784
        %1894 = vmatprep.subr.mxu0 0.0
        %1895 = vmatpush1.msra.mxu0 %v1781
        %1896 = vmatprep.subr.mxu0 0.0
        %1897 = vmatpush1.msra.mxu0 %v1778
        %1898 = vmatprep.subr.mxu0 0.0
        %1899 = vmatpush1.msra.mxu0 %v1775
        %1900 = vmatprep.subr.mxu0 0.0
        %1901 = vmatpush1.msra.mxu0 %v1772
        %1902 = vmatprep.subr.mxu0 0.0
        %1903 = vmatpush1.msra.mxu0 %v1769
        %1904 = vmatprep.subr.mxu0 0.0
        %1905 = vmatpush1.msra.mxu0 %v1766
        %1906 = vmatprep.subr.mxu0 0.0
        %1907 = vmatpush1.msra.mxu0 %v1763
        %1908 = vmatprep.subr.mxu0 0.0
        %1909 = vmatpush1.msra.mxu0 %v1760
        %1910 = vmatprep.subr.mxu0 0.0
        %1911 = vmatpush1.msra.mxu0 %v1757
        %1912 = vmatprep.subr.mxu0 0.0
        %1913 = vmatpush2.msra.mxu0 0.0
        %1914 = vmatprep.subr.mxu0 0.0
        %1915 = vmatpush2.msra.mxu0 0.0
        %1916 = vmatprep.subr.mxu0 0.0
        %1917 = vmatpush2.msra.mxu0 0.0
        %1918 = vmatprep.subr.mxu0 0.0
        %1919 = vmatpush2.msra.mxu0 0.0
        %1920 = vmatprep.subr.mxu0 0.0
        %1921 = vmatpush2.msra.mxu0 0.0
        %1922 = vmatprep.subr.mxu0 0.0
        %1923 = vmatpush2.msra.mxu0 0.0
        %1924 = vmatprep.subr.mxu0 0.0
        %1925 = vmatpush2.msra.mxu0 0.0
        %1926 = vmatprep.subr.mxu0 0.0
        %1927 = vmatpush2.msra.mxu0 0.0
        %1928 = vmatprep.subr.mxu0 0.0
        %1929 = vmatpush2.msra.mxu0 0.0
        %1930 = vmatprep.subr.mxu0 0.0
        %1931 = vmatpush2.msra.mxu0 0.0
        %1932 = vmatprep.subr.mxu0 0.0
        %1933 = vmatpush2.msra.mxu0 0.0
        %1934 = vmatprep.subr.mxu0 0.0
        %1935 = vmatpush2.msra.mxu0 0.0
        %1936 = vmatprep.subr.mxu0 0.0
        %1937 = vmatpush2.msra.mxu0 0.0
        %1938 = vmatprep.subr.mxu0 0.0
        %1939 = vmatpush2.msra.mxu0 0.0
        %1940 = vmatprep.subr.mxu0 0.0
        %1941 = vmatpush2.msra.mxu0 0.0
        %1942 = vmatprep.subr.mxu0 0.0
        %1943 = vmatpush2.msra.mxu0 0.0
        %1944 = vmatprep.mubr.f32.mxu0 0.0
        %1945 = vmatmul.mubr.f32.gmra.mxu0 %v1753
        %v1946 = vpop.f32.mrf.mxu0
        %v1947 = vadd.f32 0.0, %v1946
        %v1948 = vpop.f32.mrf.mxu0
        %1949 = vmatprep.mubr.f32.mxu0 0.0
        %1950 = vmatmul.mubr.f32.gmra.mxu0 %v1754
        %v1951 = vpop.f32.mrf.mxu0
        %v1952 = vadd.f32 0.0, %v1951
        %v1953 = vpop.f32.mrf.mxu0
        %1954 = vdwg.mxu0
        %v1955 = vld [vmem:[#allocation15] sm:$0x1]
        %1956 = vmatprep.subr.mxu0 0.0
        %1957 = vmatpush1.msra.mxu0 0.0
        %1958 = vmatprep.subr.mxu0 0.0
        %1959 = vmatpush1.msra.mxu0 0.0
        %1960 = vmatprep.subr.mxu0 0.0
        %1961 = vmatpush1.msra.mxu0 0.0
        %1962 = vmatprep.subr.mxu0 0.0
        %1963 = vmatpush1.msra.mxu0 0.0
        %1964 = vmatprep.subr.mxu0 0.0
        %1965 = vmatpush1.msra.mxu0 0.0
        %1966 = vmatprep.subr.mxu0 0.0
        %1967 = vmatpush1.msra.mxu0 0.0
        %1968 = vmatprep.subr.mxu0 0.0
        %1969 = vmatpush1.msra.mxu0 0.0
        %1970 = vmatprep.subr.mxu0 0.0
        %1971 = vmatpush1.msra.mxu0 0.0
        %1972 = vmatprep.subr.mxu0 0.0
        %1973 = vmatpush1.msra.mxu0 0.0
        %1974 = vmatprep.subr.mxu0 0.0
        %1975 = vmatpush1.msra.mxu0 0.0
        %1976 = vmatprep.subr.mxu0 0.0
        %1977 = vmatpush1.msra.mxu0 0.0
        %1978 = vmatprep.subr.mxu0 0.0
        %1979 = vmatpush1.msra.mxu0 0.0
        %1980 = vmatprep.subr.mxu0 0.0
        %1981 = vmatpush1.msra.mxu0 0.0
        %1982 = vmatprep.subr.mxu0 0.0
        %1983 = vmatpush1.msra.mxu0 0.0
        %1984 = vmatprep.subr.mxu0 0.0
        %1985 = vmatpush1.msra.mxu0 %v1876
        %1986 = vmatprep.subr.mxu0 0.0
        %1987 = vmatpush1.msra.mxu0 %v1870
        %1988 = vmatprep.subr.mxu0 0.0
        %1989 = vmatpush2.msra.mxu0 0.0
        %1990 = vmatprep.subr.mxu0 0.0
        %1991 = vmatpush2.msra.mxu0 0.0
        %1992 = vmatprep.subr.mxu0 0.0
        %1993 = vmatpush2.msra.mxu0 0.0
        %1994 = vmatprep.subr.mxu0 0.0
        %1995 = vmatpush2.msra.mxu0 0.0
        %1996 = vmatprep.subr.mxu0 0.0
        %1997 = vmatpush2.msra.mxu0 0.0
        %1998 = vmatprep.subr.mxu0 0.0
        %1999 = vmatpush2.msra.mxu0 0.0
        %2000 = vmatprep.subr.mxu0 0.0
        %2001 = vmatpush2.msra.mxu0 0.0
        %2002 = vmatprep.subr.mxu0 0.0
        %2003 = vmatpush2.msra.mxu0 0.0
        %2004 = vmatprep.subr.mxu0 0.0
        %2005 = vmatpush2.msra.mxu0 0.0
        %2006 = vmatprep.subr.mxu0 0.0
        %2007 = vmatpush2.msra.mxu0 0.0
        %2008 = vmatprep.subr.mxu0 0.0
        %2009 = vmatpush2.msra.mxu0 0.0
        %2010 = vmatprep.subr.mxu0 0.0
        %2011 = vmatpush2.msra.mxu0 0.0
        %2012 = vmatprep.subr.mxu0 0.0
        %2013 = vmatpush2.msra.mxu0 0.0
        %2014 = vmatprep.subr.mxu0 0.0
        %2015 = vmatpush2.msra.mxu0 0.0
        %2016 = vmatprep.subr.mxu0 0.0
        %2017 = vmatpush2.msra.mxu0 0.0
        %2018 = vmatprep.subr.mxu0 0.0
        %2019 = vmatpush2.msra.mxu0 0.0
        %2020 = vmatprep.mubr.f32.mxu0 0.0
        %2021 = vmatmul.mubr.f32.gmra.mxu0 %v1578
        %v2022 = vpop.f32.mrf.mxu0
        %v2023 = vadd.f32 0.0, %v2022
        %v2024 = vpop.f32.mrf.mxu0
        %2025 = vmatprep.mubr.f32.mxu0 0.0
        %2026 = vmatmul.mubr.f32.gmra.mxu0 %v1581
        %v2027 = vpop.f32.mrf.mxu0
        %v2028 = vadd.f32 0.0, %v2027
        %v2029 = vpop.f32.mrf.mxu0
        %2030 = vdwg.mxu0
        %v2031 = vadd.f32 %v1872, %v2023
        %v2032 = vadd.f32 %v1878, %v2028
        %2033 = vmatprep.subr.mxu0 0.0
        %2034 = vmatpush1.msra.mxu0 0.0
        %2035 = vmatprep.subr.mxu0 0.0
        %2036 = vmatpush1.msra.mxu0 0.0
        %2037 = vmatprep.subr.mxu0 0.0
        %2038 = vmatpush1.msra.mxu0 0.0
        %2039 = vmatprep.subr.mxu0 0.0
        %2040 = vmatpush1.msra.mxu0 0.0
        %2041 = vmatprep.subr.mxu0 0.0
        %2042 = vmatpush1.msra.mxu0 0.0
        %2043 = vmatprep.subr.mxu0 0.0
        %2044 = vmatpush1.msra.mxu0 0.0
        %2045 = vmatprep.subr.mxu0 0.0
        %2046 = vmatpush1.msra.mxu0 0.0
        %2047 = vmatprep.subr.mxu0 0.0
        %2048 = vmatpush1.msra.mxu0 0.0
        %2049 = vmatprep.subr.mxu0 0.0
        %2050 = vmatpush1.msra.mxu0 0.0
        %2051 = vmatprep.subr.mxu0 0.0
        %2052 = vmatpush1.msra.mxu0 0.0
        %2053 = vmatprep.subr.mxu0 0.0
        %2054 = vmatpush1.msra.mxu0 0.0
        %2055 = vmatprep.subr.mxu0 0.0
        %2056 = vmatpush1.msra.mxu0 0.0
        %2057 = vmatprep.subr.mxu0 0.0
        %2058 = vmatpush1.msra.mxu0 0.0
        %2059 = vmatprep.subr.mxu0 0.0
        %2060 = vmatpush1.msra.mxu0 0.0
        %2061 = vmatprep.subr.mxu0 0.0
        %2062 = vmatpush1.msra.mxu0 %v1952
        %2063 = vmatprep.subr.mxu0 0.0
        %2064 = vmatpush1.msra.mxu0 %v1947
        %2065 = vmatprep.subr.mxu0 0.0
        %2066 = vmatpush2.msra.mxu0 0.0
        %2067 = vmatprep.subr.mxu0 0.0
        %2068 = vmatpush2.msra.mxu0 0.0
        %2069 = vmatprep.subr.mxu0 0.0
        %2070 = vmatpush2.msra.mxu0 0.0
        %2071 = vmatprep.subr.mxu0 0.0
        %2072 = vmatpush2.msra.mxu0 0.0
        %2073 = vmatprep.subr.mxu0 0.0
        %2074 = vmatpush2.msra.mxu0 0.0
        %2075 = vmatprep.subr.mxu0 0.0
        %2076 = vmatpush2.msra.mxu0 0.0
        %2077 = vmatprep.subr.mxu0 0.0
        %2078 = vmatpush2.msra.mxu0 0.0
        %2079 = vmatprep.subr.mxu0 0.0
        %2080 = vmatpush2.msra.mxu0 0.0
        %2081 = vmatprep.subr.mxu0 0.0
        %2082 = vmatpush2.msra.mxu0 0.0
        %2083 = vmatprep.subr.mxu0 0.0
        %2084 = vmatpush2.msra.mxu0 0.0
        %2085 = vmatprep.subr.mxu0 0.0
        %2086 = vmatpush2.msra.mxu0 0.0
        %2087 = vmatprep.subr.mxu0 0.0
        %2088 = vmatpush2.msra.mxu0 0.0
        %2089 = vmatprep.subr.mxu0 0.0
        %2090 = vmatpush2.msra.mxu0 0.0
        %2091 = vmatprep.subr.mxu0 0.0
        %2092 = vmatpush2.msra.mxu0 0.0
        %2093 = vmatprep.subr.mxu0 0.0
        %2094 = vmatpush2.msra.mxu0 0.0
        %2095 = vmatprep.subr.mxu0 0.0
        %2096 = vmatpush2.msra.mxu0 0.0
        %2097 = vmatprep.mubr.f32.mxu0 0.0
        %2098 = vmatmul.mubr.f32.gmra.mxu0 %v1663
        %v2099 = vpop.f32.mrf.mxu0
        %v2100 = vadd.f32 0.0, %v2099
        %v2101 = vpop.f32.mrf.mxu0
        %2102 = vmatprep.mubr.f32.mxu0 0.0
        %2103 = vmatmul.mubr.f32.gmra.mxu0 %v1666
        %v2104 = vpop.f32.mrf.mxu0
        %v2105 = vadd.f32 0.0, %v2104
        %v2106 = vpop.f32.mrf.mxu0
        %2107 = vdwg.mxu0
        %v2108 = vadd.f32 %v2031, %v2100
        %v2109 = vadd.f32 %v2032, %v2105
        %v2111 = vlaneseq
        %v2112 = vshrl.u32 %v2111, 7
        %v2113 = vsub.s32 0, %v2112
        %v2114 = vrot.slane %v1955, %v2113
        %v2116 = vadd.f32 %v2108, %v2114
        %v2117 = vadd.f32 %v2109, %v2114
        %v2118 = vmax.f32 %v2116, 0.0
        %v2119 = vmax.f32 %v2117, 0.0
        %2120 = vst [vmem:[%s676] sm:$0xff] %v2118
        %2121 = vst [vmem:[%s676 + $0x8] sm:$0xff] %v2119
        %s2122 = sand.u32 %s394, 1
        %s2123 = scalar_lea.sflag [#allocation5], %s2122
        %s2124 = sand.u32 %s394, 1
        %s2125 = smul.addr %s2124, 16
        %s2126 = scalar_lea.vmem [#allocation18], %s2125
        // Predicated region
        $region121: #{tpu_custom_call.1} parent=83 // pred_check
          %p2127 = pneg %p404
        $region122: #{tpu_custom_call.1} parent=83 // pred_check_branch
          %2129 = sbr.rel (%p2127) target = $region124
        $region123: #{tpu_custom_call.1} parent=83 // pred_region
          %s2131 = ssub.s32 256, 256
          %2132 = vsyncadd %s2123, %s2131
          %s2133 = smul.addr %s40, 2
          %s2134 = smul.addr %s2133, 128
          %s2135 = scalar_lea.hbm %s16, %s2134
          %s2136 = sshll.u32 %s2126, 4
          %s2137 = int_to_ptr.vmem [resolvable:$true] %s2136
          %2142 = dma.vmem_to_hbm [thread:$0]  %s2137, 256, %s2135, %s2123, 128, 128, 8
        $region124: #{tpu_custom_call.1} parent=83 // pred_fallthru
          _
      $region84: #{tpu_custom_call.1} parent=5 // pred_fallthru
        _
      %p2143 = scmp.le.s32.totalorder 2, %s35
      // Predicated region
      $region125: #{tpu_custom_call.1} parent=5 // pred_check
        %p2144 = pneg %p2143
      $region126: #{tpu_custom_call.1} parent=5 // pred_check_branch
        %2146 = sbr.rel (%p2144) target = $region128
      $region127: #{tpu_custom_call.1} parent=5 // pred_region
        %s2147 = ssub.s32 %s35, 2
        // Predicated region
        $region129: #{tpu_custom_call.1} parent=127 // pred_check
          %p2148 = pneg %p410
        $region130: #{tpu_custom_call.1} parent=127 // pred_check_branch
          %2150 = sbr.rel (%p2148) target = $region132
        $region131: #{tpu_custom_call.1} parent=127 // pred_region
          %s2151 = sand.u32 %s395, 1
          %s2152 = scalar_lea.sflag [#allocation5], %s2151
          %s2153 = sand.u32 %s395, 1
          %s2154 = smul.addr %s2153, 16
          %s2155 = scalar_lea.vmem [#allocation18], %s2154
          %2156 = dma.done %s2152, 256
        $region132: #{tpu_custom_call.1} parent=127 // pred_fallthru
          _
      $region128: #{tpu_custom_call.1} parent=5 // pred_fallthru
        _
    $region6: #{tpu_custom_call.1} parent=1 // loop_footer
      %s39 = sadd.s32 1, %s35
    $region7: #{tpu_custom_call.1} parent=1 // loop_footer_branch
      %34 = sbr.rel target = $region3
    $region8: #{tpu_custom_call.1} parent=1 // loop_exit
      _
    %2157 = vsyncpa [#allocation4], 1
    %s2158 = scalar_lea.sflag [#allocation4], 1
    %2159 = vsyncpa %s2158, 1
    %2160 = vsyncpa [#allocation7], 1
    %s2161 = scalar_lea.sflag [#allocation7], 1
    %2162 = vsyncpa %s2161, 1
    %2163 = vsyncpa [#allocation10], 1
    %2164 = vsyncpa [#allocation13], 1
    %2165 = vsyncpa [#allocation16], 1
    %2166 = vsyncpa [#allocation5], 1
    %s2167 = scalar_lea.sflag [#allocation5], 1
    %2168 = vsyncpa %s2167, 1

</llo_original>
